<compile_context>
chip_gen: v6e
topology: v6e:2x2x1
jax: 0.10.0
libtpu: 0.0.40
codegen_flags: <defaults>
</compile_context>

<pallas_src>
import jax
import jax.numpy as jnp
from jax import lax
from jax.experimental import pallas as pl
from jax.experimental.pallas import tpu as pltpu

EPS = 1e-5

# On v6e/v7x this can be flipped to jnp.bfloat16 for ~2x MXU throughput (accumulation
# stays f32 via preferred_element_type).  Kept f32 so the 5e-3 comparison against the
# lax.Precision.HIGHEST f32 reference is guaranteed and the bn1-applied activations /
# batch statistics are not perturbed (review correctness note), and so v5e (no bf16
# VPU path) stays on the safe path.
CONV_DTYPE = jnp.float32


def _banded_conv(xp_scr, b_ref, H):
    """3x3 conv of one sample staged (with 1-row zero halo) in xp_scr ((H+2, W*C))
    against banded weights b_ref ((3, W*C, W*C)).  Row padding comes from the halo,
    width padding + kw taps + channel mixing are folded into the B matrices, so the
    MXU sees three fully lane-dense (H, WC) @ (WC, WC) matmuls and nothing else."""
    y = jnp.dot(xp_scr[0:H, :], b_ref[0], preferred_element_type=jnp.float32)
    y = y + jnp.dot(xp_scr[1:H + 1, :], b_ref[1], preferred_element_type=jnp.float32)
    y = y + jnp.dot(xp_scr[2:H + 2, :], b_ref[2], preferred_element_type=jnp.float32)
    return y


# ---------------- pass 1: conv1 (banded matmuls) + per-sample bn1 partial stats -------
def _conv1_stats_kernel(x_ref, b1_ref, y1_ref, st1_ref, xp_scr):
    Hp2, WC = xp_scr.shape
    H = Hp2 - 2
    # zero only the 1-row halo (2 x 128 lanes; cheap and megacore-safe), stage interior
    xp_scr[0:1, :] = jnp.zeros((1, WC), xp_scr.dtype)
    xp_scr[H + 1:H + 2, :] = jnp.zeros((1, WC), xp_scr.dtype)
    xp_scr[1:H + 1, :] = x_ref[0].astype(xp_scr.dtype)
    y = _banded_conv(xp_scr, b1_ref, H)                      # (H, WC) f32
    y1_ref[0] = y
    s = jnp.sum(y, axis=0, keepdims=True)                    # (1, WC) sublane reduce
    sq = jnp.sum(y * y, axis=0, keepdims=True)
    st1_ref[0] = jnp.concatenate([s, sq], axis=0)            # (2, WC) lane-dense stats


# -------- pass 2: bn1 apply + ReLU + conv2 (banded matmuls) + per-sample bn2 stats ----
def _bn1_conv2_stats_kernel(y1_ref, s1_ref, b1s_ref, b2_ref, y2_ref, st2_ref, xp_scr):
    Hp2, WC = xp_scr.shape
    H = Hp2 - 2
    # bn1 (global scale/shift precomputed, tiled to 128 lanes) + ReLU, pointwise f32
    h = jnp.maximum(y1_ref[0] * s1_ref[...] + b1s_ref[...], 0.0)
    xp_scr[0:1, :] = jnp.zeros((1, WC), xp_scr.dtype)
    xp_scr[H + 1:H + 2, :] = jnp.zeros((1, WC), xp_scr.dtype)
    xp_scr[1:H + 1, :] = h.astype(xp_scr.dtype)
    y = _banded_conv(xp_scr, b2_ref, H)
    y2_ref[0] = y
    s = jnp.sum(y, axis=0, keepdims=True)
    sq = jnp.sum(y * y, axis=0, keepdims=True)
    st2_ref[0] = jnp.concatenate([s, sq], axis=0)


# ---------------- pass 3: bn2 apply + SRM gate + residual + ReLU (lane-dense) ---------
def _bn2_srm_residual_kernel(y2_ref, xid_ref, s2_ref, b2s_ref, g_ref, out_ref):
    o = y2_ref[0] * s2_ref[...] + b2s_ref[...]                       # bn2 apply
    out_ref[0] = jnp.maximum(o * g_ref[0] + xid_ref[0], 0.0).astype(out_ref.dtype)


def _banded_conv_weights(w_oihw, W):
    """Build B of shape (3, W*C, W*C) with
       B[kh, w_in*C + ci, w_out*C + co] = w[co, ci, kh, w_in - w_out + 1]
    for |w_in - w_out| <= 1, else 0.  Then a padded input row (length W*C) matmul'd by
    B[kh] yields the kh-contribution of the 3x3 conv for a whole output row."""
    C = w_oihw.shape[0]
    Wt = jnp.transpose(w_oihw, (2, 3, 1, 0)).astype(jnp.float32)     # (kh, kw, ci, co)
    j = jnp.arange(W * C)
    w_idx, c_idx = j // C, j % C
    kw = w_idx[:, None] - w_idx[None, :] + 1                         # (WC, WC)
    valid = (kw >= 0) & (kw <= 2)
    B = Wt[:, jnp.clip(kw, 0, 2), c_idx[:, None], c_idx[None, :]]    # (3, WC, WC)
    return jnp.where(valid[None], B, 0.0).astype(CONV_DTYPE)


def basic_block_forward(x_nchw, params):
    """x_nchw: (N, C, H, W) float32 (PyTorch layout). Returns (N, C, H, W)."""
    N, C, H, W = x_nchw.shape
    WC, HW = W * C, H * W
    M = N * HW

    x_nhwc = jnp.transpose(x_nchw, (0, 2, 3, 1)).astype(jnp.float32)
    x_flat = x_nhwc.reshape(N, H, WC)                # lane-dense: lane index = w*C + c

    B1 = _banded_conv_weights(params["w1"], W)       # (3, WC, WC)
    B2 = _banded_conv_weights(params["w2"], W)

    # NOTE: with N=2 each v7x TensorCore gets a single grid step, so the double-buffer
    # pipeline never engages; at realistic batch sizes grid=(N,) gives each core many
    # steps (and samples could be batched per step to amortize the ~0.35us step cost).
    cparams = pltpu.CompilerParams(dimension_semantics=("parallel",))

    conv_cost = pl.CostEstimate(
        flops=2 * N * 3 * H * WC * WC, transcendentals=0,
        bytes_accessed=4 * (2 * N * H * WC + 3 * WC * WC + N * 2 * WC))

    # ------------------------------ pass 1 -------------------------------------------
    y1, st1 = pl.pallas_call(
        _conv1_stats_kernel,
        out_shape=(jax.ShapeDtypeStruct((N, H, WC), jnp.float32),
                   jax.ShapeDtypeStruct((N, 2, WC), jnp.float32)),
        grid=(N,),
        in_specs=[pl.BlockSpec((1, H, WC), lambda i: (i, 0, 0)),
                  pl.BlockSpec((3, WC, WC), lambda i: (0, 0, 0))],
        out_specs=(pl.BlockSpec((1, H, WC), lambda i: (i, 0, 0)),
                   pl.BlockSpec((1, 2, WC), lambda i: (i, 0, 0))),
        scratch_shapes=[pltpu.VMEM((H + 2, WC), CONV_DTYPE)],
        compiler_params=cparams,
        cost_estimate=conv_cost,
    )(x_flat, B1)

    # bn1 global (training-mode) stats -> scale/shift, O(C) glue (f32 throughout).
    tot1 = jnp.sum(st1, axis=0).reshape(2, W, C).sum(axis=1)         # (2, C)
    mu1 = tot1[0] / M
    var1 = jnp.maximum(tot1[1] / M - mu1 * mu1, 0.0)
    scale1 = params["bn1_gamma"] * lax.rsqrt(var1 + EPS)
    shift1 = params["bn1_beta"] - mu1 * scale1
    scale1_t = jnp.tile(scale1, W).reshape(1, WC)                    # 128-lane param rows
    shift1_t = jnp.tile(shift1, W).reshape(1, WC)

    # ------------------------------ pass 2 -------------------------------------------
    y2, st2 = pl.pallas_call(
        _bn1_conv2_stats_kernel,
        out_shape=(jax.ShapeDtypeStruct((N, H, WC), jnp.float32),
                   jax.ShapeDtypeStruct((N, 2, WC), jnp.float32)),
        grid=(N,),
        in_specs=[pl.BlockSpec((1, H, WC), lambda i: (i, 0, 0)),
                  pl.BlockSpec((1, WC), lambda i: (0, 0)),
                  pl.BlockSpec((1, WC), lambda i: (0, 0)),
                  pl.BlockSpec((3, WC, WC), lambda i: (0, 0, 0))],
        out_specs=(pl.BlockSpec((1, H, WC), lambda i: (i, 0, 0)),
                   pl.BlockSpec((1, 2, WC), lambda i: (i, 0, 0))),
        scratch_shapes=[pltpu.VMEM((H + 2, WC), CONV_DTYPE)],
        compiler_params=cparams,
        cost_estimate=conv_cost,
    )(y1, scale1_t, shift1_t, B2)

    # bn2 global stats + SRM gate (O(N*C) scalar glue, f32).
    sum2_pc = st2[:, 0, :].reshape(N, W, C).sum(axis=1)              # (N, C)
    sq2_pc = st2[:, 1, :].reshape(N, W, C).sum(axis=1)
    mu2 = jnp.sum(sum2_pc, axis=0) / M
    var2 = jnp.maximum(jnp.sum(sq2_pc, axis=0) / M - mu2 * mu2, 0.0)
    scale2 = params["bn2_gamma"] * lax.rsqrt(var2 + EPS)
    shift2 = params["bn2_beta"] - mu2 * scale2

    # SRM spatial stats of the bn2 output, derived from the same per-sample partials:
    # mean(a*y+b) = a*mean(y)+b,  std(a*y+b) = |a|*std(y) (unbiased, matching torch.std).
    mean_y2 = sum2_pc / HW
    var_u_y2 = jnp.maximum((sq2_pc - HW * mean_y2 * mean_y2) / (HW - 1), 0.0)
    mean_o = mean_y2 * scale2[None, :] + shift2[None, :]
    std_o = jnp.abs(scale2)[None, :] * jnp.sqrt(var_u_y2)
    z = mean_o * params["cfc"][:, 0][None, :] + std_o * params["cfc"][:, 1][None, :]
    zm = jnp.mean(z, axis=0, keepdims=True)                          # BN over batch
    zv = jnp.mean((z - zm) ** 2, axis=0, keepdims=True)
    z_hat = (z - zm) * (params["srm_bn_gamma"][None, :] * lax.rsqrt(zv + EPS)) \
        + params["srm_bn_beta"][None, :]
    gate = jax.nn.sigmoid(z_hat)                                     # (N, C)

    scale2_t = jnp.tile(scale2, W).reshape(1, WC)
    shift2_t = jnp.tile(shift2, W).reshape(1, WC)
    gate_t = jnp.tile(gate, (1, W)).reshape(N, 1, WC)

    # ------------------------------ pass 3 -------------------------------------------
    out_flat = pl.pallas_call(
        _bn2_srm_residual_kernel,
        out_shape=jax.ShapeDtypeStruct((N, H, WC), jnp.float32),
        grid=(N,),
        in_specs=[pl.BlockSpec((1, H, WC), lambda i: (i, 0, 0)),
                  pl.BlockSpec((1, H, WC), lambda i: (i, 0, 0)),
                  pl.BlockSpec((1, WC), lambda i: (0, 0)),
                  pl.BlockSpec((1, WC), lambda i: (0, 0)),
                  pl.BlockSpec((1, 1, WC), lambda i: (i, 0, 0))],
        out_specs=pl.BlockSpec((1, H, WC), lambda i: (i, 0, 0)),
        compiler_params=cparams,
        cost_estimate=pl.CostEstimate(flops=4 * N * H * WC, transcendentals=0,
                                      bytes_accessed=4 * 3 * N * H * WC),
    )(y2, x_flat, scale2_t, shift2_t, gate_t)

    return jnp.transpose(out_flat.reshape(N, H, W, C), (0, 3, 1, 2))


def reference_forward(x, p):
    """Pure-JAX reference matching the PyTorch forward (training-mode BN, NCHW)."""
    def conv3x3(x, w):
        return lax.conv_general_dilated(
            x, w, (1, 1), ((1, 1), (1, 1)),
            dimension_numbers=("NCHW", "OIHW", "NCHW"),
            precision=lax.Precision.HIGHEST)

    def bn_train(x, gamma, beta):
        mu = jnp.mean(x, axis=(0, 2, 3), keepdims=True)
        var = jnp.mean((x - mu) ** 2, axis=(0, 2, 3), keepdims=True)
        return ((x - mu) / jnp.sqrt(var + EPS) * gamma.reshape(1, -1, 1, 1)
                + beta.reshape(1, -1, 1, 1))

    out = conv3x3(x, p["w1"])
    out = jax.nn.relu(bn_train(out, p["bn1_gamma"], p["bn1_beta"]))
    out = conv3x3(out, p["w2"])
    out = bn_train(out, p["bn2_gamma"], p["bn2_beta"])

    N, C, H, W = out.shape
    flat = out.reshape(N, C, H * W)
    mean = flat.mean(axis=2)
    std = jnp.sqrt(jnp.sum((flat - mean[:, :, None]) ** 2, axis=2) / (H * W - 1))
    t = jnp.stack([mean, std], axis=2)                       # (N, C, 2)
    z = jnp.sum(t * p["cfc"][None], axis=2)                  # (N, C)
    zm = z.mean(axis=0, keepdims=True)
    zv = jnp.mean((z - zm) ** 2, axis=0, keepdims=True)
    z_hat = (z - zm) / jnp.sqrt(zv + EPS) * p["srm_bn_gamma"][None] + p["srm_bn_beta"][None]
    gate = jax.nn.sigmoid(z_hat)
    out = out * gate[:, :, None, None]
    return jax.nn.relu(out + x)


if __name__ == "__main__":
    # Small shapes: inplanes == planes (required for downsample=None residual add).
    # W*C == 128 makes every pass exactly lane-dense.
    N, C, H, W = 2, 8, 16, 16
    key = jax.random.PRNGKey(0)
    ks = jax.random.split(key, 10)

    params = {
        "w1": 0.1 * jax.random.normal(ks[0], (C, C, 3, 3), jnp.float32),
        "bn1_gamma": 1.0 + 0.1 * jax.random.normal(ks[1], (C,), jnp.float32),
        "bn1_beta": 0.1 * jax.random.normal(ks[2], (C,), jnp.float32),
        "w2": 0.1 * jax.random.normal(ks[3], (C, C, 3, 3), jnp.float32),
        "bn2_gamma": 1.0 + 0.1 * jax.random.normal(ks[4], (C,), jnp.float32),
        "bn2_beta": 0.1 * jax.random.normal(ks[5], (C,), jnp.float32),
        # PyTorch __init__ fills cfc with zeros (gate == 0.5); random values here so the
        # SRM mean/std statistics path is actually exercised (same shape (C, 2)).
        "cfc": 0.1 * jax.random.normal(ks[6], (C, 2), jnp.float32),
        "srm_bn_gamma": 1.0 + 0.1 * jax.random.normal(ks[7], (C,), jnp.float32),
        "srm_bn_beta": 0.1 * jax.random.normal(ks[8], (C,), jnp.float32),
    }
    x = jax.random.normal(ks[9], (N, C, H, W), jnp.float32)

    fwd = jax.jit(basic_block_forward)
    out = jax.block_until_ready(fwd(x, params))

    ref = reference_forward(x, params)
    err = float(jnp.max(jnp.abs(out - ref)))
    assert out.shape == (N, C, H, W)
    assert err < 5e-3, f"max abs err {err}"
    print("KERNEL_OK")
</pallas_src>

<mosaic_0001>
module attributes {stable_mosaic.version = 11 : i64} {
  func.func @_conv1_stats_kernel(%arg0: i32, %arg1: memref<1x16x128xf32, #tpu.memory_space<vmem>>, %arg2: memref<3x128x128xf32, #tpu.memory_space<vmem>>, %arg3: memref<1x16x128xf32, #tpu.memory_space<vmem>>, %arg4: memref<1x2x128xf32, #tpu.memory_space<vmem>>, %arg5: memref<18x128xf32, #tpu.memory_space<vmem>>) attributes {dimension_semantics = [#tpu.dimension_semantics<parallel>], iteration_bounds = array<i64: 2>, scalar_prefetch = 0 : i64, scratch_operands = 1 : i64, tpu.core_type = #tpu.core_type<tc>, window_params = [{transform_indices = @transform_0, window_bounds = array<i64: 1, 16, 128>}, {pipeline_mode = #tpu.pipeline_mode<synchronous>, transform_indices = @transform_1, window_bounds = array<i64: 3, 128, 128>}, {transform_indices = @transform_2, window_bounds = array<i64: 1, 16, 128>}, {transform_indices = @transform_3, window_bounds = array<i64: 1, 2, 128>}]} {
    %cst = arith.constant 0.000000e+00 : f32
    %0 = vector.broadcast %cst : f32 to vector<1x128xf32>
    %c0 = arith.constant 0 : index
    %c0_0 = arith.constant 0 : index
    %1 = vector.load %arg5[%c0, %c0_0] : memref<18x128xf32, #tpu.memory_space<vmem>>, vector<1x128xf32>
    tpu.vector_store %arg5[%c0, %c0_0], %0 {strides = array<i32>} : memref<18x128xf32, #tpu.memory_space<vmem>>, vector<1x128xf32>,
    %cst_1 = arith.constant 0.000000e+00 : f32
    %2 = vector.broadcast %cst_1 : f32 to vector<1x128xf32>
    %c17 = arith.constant 17 : index
    %c0_2 = arith.constant 0 : index
    %3 = vector.load %arg5[%c17, %c0_2] : memref<18x128xf32, #tpu.memory_space<vmem>>, vector<1x128xf32>
    tpu.vector_store %arg5[%c17, %c0_2], %2 {strides = array<i32>} : memref<18x128xf32, #tpu.memory_space<vmem>>, vector<1x128xf32>,
    %c0_3 = arith.constant 0 : index
    %c0_4 = arith.constant 0 : index
    %c0_5 = arith.constant 0 : index
    %4 = vector.load %arg1[%c0_3, %c0_4, %c0_5] : memref<1x16x128xf32, #tpu.memory_space<vmem>>, vector<1x16x128xf32>
    %5 = vector.shape_cast %4 : vector<1x16x128xf32> to vector<16x128xf32>
    %c1 = arith.constant 1 : index
    %c0_6 = arith.constant 0 : index
    %6 = vector.load %arg5[%c1, %c0_6] : memref<18x128xf32, #tpu.memory_space<vmem>>, vector<16x128xf32>
    tpu.vector_store %arg5[%c1, %c0_6], %5 {strides = array<i32>} : memref<18x128xf32, #tpu.memory_space<vmem>>, vector<16x128xf32>,
    %c0_7 = arith.constant 0 : index
    %c0_8 = arith.constant 0 : index
    %7 = vector.load %arg5[%c0_7, %c0_8] : memref<18x128xf32, #tpu.memory_space<vmem>>, vector<16x128xf32>
    %c0_9 = arith.constant 0 : index
    %c0_10 = arith.constant 0 : index
    %c0_11 = arith.constant 0 : index
    %8 = vector.load %arg2[%c0_9, %c0_10, %c0_11] : memref<3x128x128xf32, #tpu.memory_space<vmem>>, vector<1x128x128xf32>
    %9 = vector.shape_cast %8 : vector<1x128x128xf32> to vector<128x128xf32>
    %cst_12 = arith.constant dense<0.000000e+00> : vector<16x128xf32>
    %10 = tpu.matmul %7, %9, %cst_12 {dimension_numbers = #tpu.dot_dimension_numbers<[1], [0], [0], [1], [0, 0, 1, 1], [], []>} : vector<16x128xf32>, vector<128x128xf32>, vector<16x128xf32> -> vector<16x128xf32>
    %c1_13 = arith.constant 1 : index
    %c0_14 = arith.constant 0 : index
    %11 = vector.load %arg5[%c1_13, %c0_14] : memref<18x128xf32, #tpu.memory_space<vmem>>, vector<16x128xf32>
    %c1_15 = arith.constant 1 : index
    %c0_16 = arith.constant 0 : index
    %c0_17 = arith.constant 0 : index
    %12 = vector.load %arg2[%c1_15, %c0_16, %c0_17] : memref<3x128x128xf32, #tpu.memory_space<vmem>>, vector<1x128x128xf32>
    %13 = vector.shape_cast %12 : vector<1x128x128xf32> to vector<128x128xf32>
    %cst_18 = arith.constant dense<0.000000e+00> : vector<16x128xf32>
    %14 = tpu.matmul %11, %13, %cst_18 {dimension_numbers = #tpu.dot_dimension_numbers<[1], [0], [0], [1], [0, 0, 1, 1], [], []>} : vector<16x128xf32>, vector<128x128xf32>, vector<16x128xf32> -> vector<16x128xf32>
    %15 = arith.addf %10, %14 : vector<16x128xf32>
    %c2 = arith.constant 2 : index
    %c0_19 = arith.constant 0 : index
    %16 = vector.load %arg5[%c2, %c0_19] : memref<18x128xf32, #tpu.memory_space<vmem>>, vector<16x128xf32>
    %c2_20 = arith.constant 2 : index
    %c0_21 = arith.constant 0 : index
    %c0_22 = arith.constant 0 : index
    %17 = vector.load %arg2[%c2_20, %c0_21, %c0_22] : memref<3x128x128xf32, #tpu.memory_space<vmem>>, vector<1x128x128xf32>
    %18 = vector.shape_cast %17 : vector<1x128x128xf32> to vector<128x128xf32>
    %cst_23 = arith.constant dense<0.000000e+00> : vector<16x128xf32>
    %19 = tpu.matmul %16, %18, %cst_23 {dimension_numbers = #tpu.dot_dimension_numbers<[1], [0], [0], [1], [0, 0, 1, 1], [], []>} : vector<16x128xf32>, vector<128x128xf32>, vector<16x128xf32> -> vector<16x128xf32>
    %20 = arith.addf %15, %19 : vector<16x128xf32>
    %c0_24 = arith.constant 0 : index
    %c0_25 = arith.constant 0 : index
    %c0_26 = arith.constant 0 : index
    %21 = vector.load %arg3[%c0_24, %c0_25, %c0_26] : memref<1x16x128xf32, #tpu.memory_space<vmem>>, vector<1x16x128xf32>
    %22 = vector.shape_cast %21 : vector<1x16x128xf32> to vector<16x128xf32>
    %23 = vector.shape_cast %20 : vector<16x128xf32> to vector<1x16x128xf32>
    tpu.vector_store %arg3[%c0_24, %c0_25, %c0_26], %23 {strides = array<i32>} : memref<1x16x128xf32, #tpu.memory_space<vmem>>, vector<1x16x128xf32>,
    %cst_27 = arith.constant dense<0.000000e+00> : vector<128xf32>
    %24 = vector.multi_reduction <add>, %20, %cst_27 [0] : vector<16x128xf32> to vector<128xf32>
    %25 = vector.shape_cast %24 : vector<128xf32> to vector<1x128xf32>
    %26 = arith.mulf %20, %20 : vector<16x128xf32>
    %cst_28 = arith.constant dense<0.000000e+00> : vector<128xf32>
    %27 = vector.multi_reduction <add>, %26, %cst_28 [0] : vector<16x128xf32> to vector<128xf32>
    %28 = vector.shape_cast %27 : vector<128xf32> to vector<1x128xf32>
    %29 = tpu.concatenate %25, %28 in 0 : vector<1x128xf32>, vector<1x128xf32> -> vector<2x128xf32>
    %c0_29 = arith.constant 0 : index
    %c0_30 = arith.constant 0 : index
    %c0_31 = arith.constant 0 : index
    %30 = vector.load %arg4[%c0_29, %c0_30, %c0_31] : memref<1x2x128xf32, #tpu.memory_space<vmem>>, vector<1x2x128xf32>
    %31 = vector.shape_cast %30 : vector<1x2x128xf32> to vector<2x128xf32>
    %32 = vector.shape_cast %29 : vector<2x128xf32> to vector<1x2x128xf32>
    tpu.vector_store %arg4[%c0_29, %c0_30, %c0_31], %32 {strides = array<i32>} : memref<1x2x128xf32, #tpu.memory_space<vmem>>, vector<1x2x128xf32>,
    return
  }
  func.func @transform_0(%arg0: i32) -> (i32, i32, i32) {
    %c0_i32 = arith.constant 0 : i32
    %c0_i32_0 = arith.constant 0 : i32
    %c0_i32_1 = arith.constant 0 : i32
    return %arg0, %c0_i32, %c0_i32_0 : i32, i32, i32
  }
  func.func @transform_1(%arg0: i32) -> (i32, i32, i32) {
    %c0_i32 = arith.constant 0 : i32
    %c0_i32_0 = arith.constant 0 : i32
    %c0_i32_1 = arith.constant 0 : i32
    %c0_i32_2 = arith.constant 0 : i32
    return %c0_i32, %c0_i32_0, %c0_i32_1 : i32, i32, i32
  }
  func.func @transform_2(%arg0: i32) -> (i32, i32, i32) {
    %c0_i32 = arith.constant 0 : i32
    %c0_i32_0 = arith.constant 0 : i32
    %c0_i32_1 = arith.constant 0 : i32
    return %arg0, %c0_i32, %c0_i32_0 : i32, i32, i32
  }
  func.func @transform_3(%arg0: i32) -> (i32, i32, i32) {
    %c0_i32 = arith.constant 0 : i32
    %c0_i32_0 = arith.constant 0 : i32
    %c0_i32_1 = arith.constant 0 : i32
    return %arg0, %c0_i32, %c0_i32_0 : i32, i32, i32
  }
}

module attributes {stable_mosaic.version = 11 : i64} {
  func.func @_bn1_conv2_stats_kernel(%arg0: i32, %arg1: memref<1x16x128xf32, #tpu.memory_space<vmem>>, %arg2: memref<1x128xf32, #tpu.memory_space<vmem>>, %arg3: memref<1x128xf32, #tpu.memory_space<vmem>>, %arg4: memref<3x128x128xf32, #tpu.memory_space<vmem>>, %arg5: memref<1x16x128xf32, #tpu.memory_space<vmem>>, %arg6: memref<1x2x128xf32, #tpu.memory_space<vmem>>, %arg7: memref<18x128xf32, #tpu.memory_space<vmem>>) attributes {dimension_semantics = [#tpu.dimension_semantics<parallel>], iteration_bounds = array<i64: 2>, scalar_prefetch = 0 : i64, scratch_operands = 1 : i64, tpu.core_type = #tpu.core_type<tc>, window_params = [{transform_indices = @transform_0, window_bounds = array<i64: 1, 16, 128>}, {pipeline_mode = #tpu.pipeline_mode<synchronous>, transform_indices = @transform_1, window_bounds = array<i64: 1, 128>}, {pipeline_mode = #tpu.pipeline_mode<synchronous>, transform_indices = @transform_2, window_bounds = array<i64: 1, 128>}, {pipeline_mode = #tpu.pipeline_mode<synchronous>, transform_indices = @transform_3, window_bounds = array<i64: 3, 128, 128>}, {transform_indices = @transform_4, window_bounds = array<i64: 1, 16, 128>}, {transform_indices = @transform_5, window_bounds = array<i64: 1, 2, 128>}]} {
    %c0 = arith.constant 0 : index
    %c0_0 = arith.constant 0 : index
    %c0_1 = arith.constant 0 : index
    %0 = vector.load %arg1[%c0, %c0_0, %c0_1] : memref<1x16x128xf32, #tpu.memory_space<vmem>>, vector<1x16x128xf32>
    %1 = vector.shape_cast %0 : vector<1x16x128xf32> to vector<16x128xf32>
    %c0_2 = arith.constant 0 : index
    %c0_3 = arith.constant 0 : index
    %2 = vector.load %arg2[%c0_2, %c0_3] : memref<1x128xf32, #tpu.memory_space<vmem>>, vector<1x128xf32>
    %3 = vector.broadcast %2 : vector<1x128xf32> to vector<16x128xf32>
    %4 = arith.mulf %1, %3 : vector<16x128xf32>
    %c0_4 = arith.constant 0 : index
    %c0_5 = arith.constant 0 : index
    %5 = vector.load %arg3[%c0_4, %c0_5] : memref<1x128xf32, #tpu.memory_space<vmem>>, vector<1x128xf32>
    %6 = vector.broadcast %5 : vector<1x128xf32> to vector<16x128xf32>
    %7 = arith.addf %4, %6 : vector<16x128xf32>
    %cst = arith.constant 0.000000e+00 : f32
    %8 = vector.broadcast %cst : f32 to vector<16x128xf32>
    %9 = arith.maximumf %7, %8 : vector<16x128xf32>
    %cst_6 = arith.constant 0.000000e+00 : f32
    %10 = vector.broadcast %cst_6 : f32 to vector<1x128xf32>
    %c0_7 = arith.constant 0 : index
    %c0_8 = arith.constant 0 : index
    %11 = vector.load %arg7[%c0_7, %c0_8] : memref<18x128xf32, #tpu.memory_space<vmem>>, vector<1x128xf32>
    tpu.vector_store %arg7[%c0_7, %c0_8], %10 {strides = array<i32>} : memref<18x128xf32, #tpu.memory_space<vmem>>, vector<1x128xf32>,
    %cst_9 = arith.constant 0.000000e+00 : f32
    %12 = vector.broadcast %cst_9 : f32 to vector<1x128xf32>
    %c17 = arith.constant 17 : index
    %c0_10 = arith.constant 0 : index
    %13 = vector.load %arg7[%c17, %c0_10] : memref<18x128xf32, #tpu.memory_space<vmem>>, vector<1x128xf32>
    tpu.vector_store %arg7[%c17, %c0_10], %12 {strides = array<i32>} : memref<18x128xf32, #tpu.memory_space<vmem>>, vector<1x128xf32>,
    %c1 = arith.constant 1 : index
    %c0_11 = arith.constant 0 : index
    %14 = vector.load %arg7[%c1, %c0_11] : memref<18x128xf32, #tpu.memory_space<vmem>>, vector<16x128xf32>
    tpu.vector_store %arg7[%c1, %c0_11], %9 {strides = array<i32>} : memref<18x128xf32, #tpu.memory_space<vmem>>, vector<16x128xf32>,
    %c0_12 = arith.constant 0 : index
    %c0_13 = arith.constant 0 : index
    %15 = vector.load %arg7[%c0_12, %c0_13] : memref<18x128xf32, #tpu.memory_space<vmem>>, vector<16x128xf32>
    %c0_14 = arith.constant 0 : index
    %c0_15 = arith.constant 0 : index
    %c0_16 = arith.constant 0 : index
    %16 = vector.load %arg4[%c0_14, %c0_15, %c0_16] : memref<3x128x128xf32, #tpu.memory_space<vmem>>, vector<1x128x128xf32>
    %17 = vector.shape_cast %16 : vector<1x128x128xf32> to vector<128x128xf32>
    %cst_17 = arith.constant dense<0.000000e+00> : vector<16x128xf32>
    %18 = tpu.matmul %15, %17, %cst_17 {dimension_numbers = #tpu.dot_dimension_numbers<[1], [0], [0], [1], [0, 0, 1, 1], [], []>} : vector<16x128xf32>, vector<128x128xf32>, vector<16x128xf32> -> vector<16x128xf32>
    %c1_18 = arith.constant 1 : index
    %c0_19 = arith.constant 0 : index
    %19 = vector.load %arg7[%c1_18, %c0_19] : memref<18x128xf32, #tpu.memory_space<vmem>>, vector<16x128xf32>
    %c1_20 = arith.constant 1 : index
    %c0_21 = arith.constant 0 : index
    %c0_22 = arith.constant 0 : index
    %20 = vector.load %arg4[%c1_20, %c0_21, %c0_22] : memref<3x128x128xf32, #tpu.memory_space<vmem>>, vector<1x128x128xf32>
    %21 = vector.shape_cast %20 : vector<1x128x128xf32> to vector<128x128xf32>
    %cst_23 = arith.constant dense<0.000000e+00> : vector<16x128xf32>
    %22 = tpu.matmul %19, %21, %cst_23 {dimension_numbers = #tpu.dot_dimension_numbers<[1], [0], [0], [1], [0, 0, 1, 1], [], []>} : vector<16x128xf32>, vector<128x128xf32>, vector<16x128xf32> -> vector<16x128xf32>
    %23 = arith.addf %18, %22 : vector<16x128xf32>
    %c2 = arith.constant 2 : index
    %c0_24 = arith.constant 0 : index
    %24 = vector.load %arg7[%c2, %c0_24] : memref<18x128xf32, #tpu.memory_space<vmem>>, vector<16x128xf32>
    %c2_25 = arith.constant 2 : index
    %c0_26 = arith.constant 0 : index
    %c0_27 = arith.constant 0 : index
    %25 = vector.load %arg4[%c2_25, %c0_26, %c0_27] : memref<3x128x128xf32, #tpu.memory_space<vmem>>, vector<1x128x128xf32>
    %26 = vector.shape_cast %25 : vector<1x128x128xf32> to vector<128x128xf32>
    %cst_28 = arith.constant dense<0.000000e+00> : vector<16x128xf32>
    %27 = tpu.matmul %24, %26, %cst_28 {dimension_numbers = #tpu.dot_dimension_numbers<[1], [0], [0], [1], [0, 0, 1, 1], [], []>} : vector<16x128xf32>, vector<128x128xf32>, vector<16x128xf32> -> vector<16x128xf32>
    %28 = arith.addf %23, %27 : vector<16x128xf32>
    %c0_29 = arith.constant 0 : index
    %c0_30 = arith.constant 0 : index
    %c0_31 = arith.constant 0 : index
    %29 = vector.load %arg5[%c0_29, %c0_30, %c0_31] : memref<1x16x128xf32, #tpu.memory_space<vmem>>, vector<1x16x128xf32>
    %30 = vector.shape_cast %29 : vector<1x16x128xf32> to vector<16x128xf32>
    %31 = vector.shape_cast %28 : vector<16x128xf32> to vector<1x16x128xf32>
    tpu.vector_store %arg5[%c0_29, %c0_30, %c0_31], %31 {strides = array<i32>} : memref<1x16x128xf32, #tpu.memory_space<vmem>>, vector<1x16x128xf32>,
    %cst_32 = arith.constant dense<0.000000e+00> : vector<128xf32>
    %32 = vector.multi_reduction <add>, %28, %cst_32 [0] : vector<16x128xf32> to vector<128xf32>
    %33 = vector.shape_cast %32 : vector<128xf32> to vector<1x128xf32>
    %34 = arith.mulf %28, %28 : vector<16x128xf32>
    %cst_33 = arith.constant dense<0.000000e+00> : vector<128xf32>
    %35 = vector.multi_reduction <add>, %34, %cst_33 [0] : vector<16x128xf32> to vector<128xf32>
    %36 = vector.shape_cast %35 : vector<128xf32> to vector<1x128xf32>
    %37 = tpu.concatenate %33, %36 in 0 : vector<1x128xf32>, vector<1x128xf32> -> vector<2x128xf32>
    %c0_34 = arith.constant 0 : index
    %c0_35 = arith.constant 0 : index
    %c0_36 = arith.constant 0 : index
    %38 = vector.load %arg6[%c0_34, %c0_35, %c0_36] : memref<1x2x128xf32, #tpu.memory_space<vmem>>, vector<1x2x128xf32>
    %39 = vector.shape_cast %38 : vector<1x2x128xf32> to vector<2x128xf32>
    %40 = vector.shape_cast %37 : vector<2x128xf32> to vector<1x2x128xf32>
    tpu.vector_store %arg6[%c0_34, %c0_35, %c0_36], %40 {strides = array<i32>} : memref<1x2x128xf32, #tpu.memory_space<vmem>>, vector<1x2x128xf32>,
    return
  }
  func.func @transform_0(%arg0: i32) -> (i32, i32, i32) {
    %c0_i32 = arith.constant 0 : i32
    %c0_i32_0 = arith.constant 0 : i32
    %c0_i32_1 = arith.constant 0 : i32
    return %arg0, %c0_i32, %c0_i32_0 : i32, i32, i32
  }
  func.func @transform_1(%arg0: i32) -> (i32, i32) {
    %c0_i32 = arith.constant 0 : i32
    %c0_i32_0 = arith.constant 0 : i32
    %c0_i32_1 = arith.constant 0 : i32
    return %c0_i32, %c0_i32_0 : i32, i32
  }
  func.func @transform_2(%arg0: i32) -> (i32, i32) {
    %c0_i32 = arith.constant 0 : i32
    %c0_i32_0 = arith.constant 0 : i32
    %c0_i32_1 = arith.constant 0 : i32
    return %c0_i32, %c0_i32_0 : i32, i32
  }
  func.func @transform_3(%arg0: i32) -> (i32, i32, i32) {
    %c0_i32 = arith.constant 0 : i32
    %c0_i32_0 = arith.constant 0 : i32
    %c0_i32_1 = arith.constant 0 : i32
    %c0_i32_2 = arith.constant 0 : i32
    return %c0_i32, %c0_i32_0, %c0_i32_1 : i32, i32, i32
  }
  func.func @transform_4(%arg0: i32) -> (i32, i32, i32) {
    %c0_i32 = arith.constant 0 : i32
    %c0_i32_0 = arith.constant 0 : i32
    %c0_i32_1 = arith.constant 0 : i32
    return %arg0, %c0_i32, %c0_i32_0 : i32, i32, i32
  }
  func.func @transform_5(%arg0: i32) -> (i32, i32, i32) {
    %c0_i32 = arith.constant 0 : i32
    %c0_i32_0 = arith.constant 0 : i32
    %c0_i32_1 = arith.constant 0 : i32
    return %arg0, %c0_i32, %c0_i32_0 : i32, i32, i32
  }
}

module attributes {stable_mosaic.version = 11 : i64} {
  func.func @_bn2_srm_residual_kernel(%arg0: i32, %arg1: memref<1x16x128xf32, #tpu.memory_space<vmem>>, %arg2: memref<1x16x128xf32, #tpu.memory_space<vmem>>, %arg3: memref<1x128xf32, #tpu.memory_space<vmem>>, %arg4: memref<1x128xf32, #tpu.memory_space<vmem>>, %arg5: memref<1x1x128xf32, #tpu.memory_space<vmem>>, %arg6: memref<1x16x128xf32, #tpu.memory_space<vmem>>) attributes {dimension_semantics = [#tpu.dimension_semantics<parallel>], iteration_bounds = array<i64: 2>, scalar_prefetch = 0 : i64, scratch_operands = 0 : i64, tpu.core_type = #tpu.core_type<tc>, window_params = [{transform_indices = @transform_0, window_bounds = array<i64: 1, 16, 128>}, {transform_indices = @transform_1, window_bounds = array<i64: 1, 16, 128>}, {pipeline_mode = #tpu.pipeline_mode<synchronous>, transform_indices = @transform_2, window_bounds = array<i64: 1, 128>}, {pipeline_mode = #tpu.pipeline_mode<synchronous>, transform_indices = @transform_3, window_bounds = array<i64: 1, 128>}, {transform_indices = @transform_4, window_bounds = array<i64: 1, 1, 128>}, {transform_indices = @transform_5, window_bounds = array<i64: 1, 16, 128>}]} {
    %c0 = arith.constant 0 : index
    %c0_0 = arith.constant 0 : index
    %c0_1 = arith.constant 0 : index
    %0 = vector.load %arg1[%c0, %c0_0, %c0_1] : memref<1x16x128xf32, #tpu.memory_space<vmem>>, vector<1x16x128xf32>
    %1 = vector.shape_cast %0 : vector<1x16x128xf32> to vector<16x128xf32>
    %c0_2 = arith.constant 0 : index
    %c0_3 = arith.constant 0 : index
    %2 = vector.load %arg3[%c0_2, %c0_3] : memref<1x128xf32, #tpu.memory_space<vmem>>, vector<1x128xf32>
    %3 = vector.broadcast %2 : vector<1x128xf32> to vector<16x128xf32>
    %4 = arith.mulf %1, %3 : vector<16x128xf32>
    %c0_4 = arith.constant 0 : index
    %c0_5 = arith.constant 0 : index
    %5 = vector.load %arg4[%c0_4, %c0_5] : memref<1x128xf32, #tpu.memory_space<vmem>>, vector<1x128xf32>
    %6 = vector.broadcast %5 : vector<1x128xf32> to vector<16x128xf32>
    %7 = arith.addf %4, %6 : vector<16x128xf32>
    %c0_6 = arith.constant 0 : index
    %c0_7 = arith.constant 0 : index
    %c0_8 = arith.constant 0 : index
    %8 = vector.load %arg5[%c0_6, %c0_7, %c0_8] : memref<1x1x128xf32, #tpu.memory_space<vmem>>, vector<1x1x128xf32>
    %9 = vector.shape_cast %8 : vector<1x1x128xf32> to vector<1x128xf32>
    %10 = vector.broadcast %9 : vector<1x128xf32> to vector<16x128xf32>
    %11 = arith.mulf %7, %10 : vector<16x128xf32>
    %c0_9 = arith.constant 0 : index
    %c0_10 = arith.constant 0 : index
    %c0_11 = arith.constant 0 : index
    %12 = vector.load %arg2[%c0_9, %c0_10, %c0_11] : memref<1x16x128xf32, #tpu.memory_space<vmem>>, vector<1x16x128xf32>
    %13 = vector.shape_cast %12 : vector<1x16x128xf32> to vector<16x128xf32>
    %14 = arith.addf %11, %13 : vector<16x128xf32>
    %cst = arith.constant 0.000000e+00 : f32
    %15 = vector.broadcast %cst : f32 to vector<16x128xf32>
    %16 = arith.maximumf %14, %15 : vector<16x128xf32>
    %c0_12 = arith.constant 0 : index
    %c0_13 = arith.constant 0 : index
    %c0_14 = arith.constant 0 : index
    %17 = vector.load %arg6[%c0_12, %c0_13, %c0_14] : memref<1x16x128xf32, #tpu.memory_space<vmem>>, vector<1x16x128xf32>
    %18 = vector.shape_cast %17 : vector<1x16x128xf32> to vector<16x128xf32>
    %19 = vector.shape_cast %16 : vector<16x128xf32> to vector<1x16x128xf32>
    tpu.vector_store %arg6[%c0_12, %c0_13, %c0_14], %19 {strides = array<i32>} : memref<1x16x128xf32, #tpu.memory_space<vmem>>, vector<1x16x128xf32>,
    return
  }
  func.func @transform_0(%arg0: i32) -> (i32, i32, i32) {
    %c0_i32 = arith.constant 0 : i32
    %c0_i32_0 = arith.constant 0 : i32
    %c0_i32_1 = arith.constant 0 : i32
    return %arg0, %c0_i32, %c0_i32_0 : i32, i32, i32
  }
  func.func @transform_1(%arg0: i32) -> (i32, i32, i32) {
    %c0_i32 = arith.constant 0 : i32
    %c0_i32_0 = arith.constant 0 : i32
    %c0_i32_1 = arith.constant 0 : i32
    return %arg0, %c0_i32, %c0_i32_0 : i32, i32, i32
  }
  func.func @transform_2(%arg0: i32) -> (i32, i32) {
    %c0_i32 = arith.constant 0 : i32
    %c0_i32_0 = arith.constant 0 : i32
    %c0_i32_1 = arith.constant 0 : i32
    return %c0_i32, %c0_i32_0 : i32, i32
  }
  func.func @transform_3(%arg0: i32) -> (i32, i32) {
    %c0_i32 = arith.constant 0 : i32
    %c0_i32_0 = arith.constant 0 : i32
    %c0_i32_1 = arith.constant 0 : i32
    return %c0_i32, %c0_i32_0 : i32, i32
  }
  func.func @transform_4(%arg0: i32) -> (i32, i32, i32) {
    %c0_i32 = arith.constant 0 : i32
    %c0_i32_0 = arith.constant 0 : i32
    %c0_i32_1 = arith.constant 0 : i32
    return %arg0, %c0_i32, %c0_i32_0 : i32, i32, i32
  }
  func.func @transform_5(%arg0: i32) -> (i32, i32, i32) {
    %c0_i32 = arith.constant 0 : i32
    %c0_i32_0 = arith.constant 0 : i32
    %c0_i32_1 = arith.constant 0 : i32
    return %arg0, %c0_i32, %c0_i32_0 : i32, i32, i32
  }
}

</mosaic_0001>

<llo_original>
// kernel: tile.28
$region0: #{tile.28}
  #allocation0 [shape = 's32[1]{0}', space=sflag, size = 0x4, scoped, tag = 'scoped memory for tile.28']
  %s0 = inlined_call_operand.vmem [shape: f32[8], index: 0, kind: input, shape index: {}]
  %s1 = inlined_call_operand.vmem [shape: f32[16,8], index: 1, kind: output, shape index: {}]
  // Predicated region
  $region2: #{tile.28} parent=0 // pred_check
    _
  $region3: #{tile.28} parent=0 // pred_check_branch
    %3 = sbr.rel (0) target = $region5
  $region4: #{tile.28} parent=0 // pred_region
    _
  $region5: #{tile.28} parent=0 // pred_fallthru
    _
  %v4 = vld [vmem:[%s0] ss:$0 sm:$0xff]
  %5 = vst [vmem:[%s1] sm:$0xff] %v4
  %s6 = scalar_lea.vmem %s1, 8
  %7 = vst [vmem:[%s6] sm:$0xff] %v4

// kernel: tile.29
$region0: #{tile.29}
  %s0 = inlined_call_operand.vmem [shape: f32[16,8], index: 0, kind: input, shape index: {}]
  %s1 = inlined_call_operand.vmem [shape: f32[1,128], index: 1, kind: output, shape index: {}]
  $region1: #{tile.29} parent=0
    #allocation0 [shape = 'u8[4096]{0}', space=vmem, size = 0x1000, scoped, tag = 'scoped mem for output reshape']
    %v2 = vld [vmem:[%s0] sm:$0x1]
    %vm3 = vcmask 64512
    %4 = vst.msk [vmem:[#allocation0] sm:$0x1] %vm3, %v2
    %s5 = scalar_lea.vmem %s0, 15
    %v6 = vld [vmem:[%s5] sm:$0x1]
    %7 = vrot.lane.b32.xlu0 %v6, 120
    %v8 = vpop.permute.xlu0 %7
    %vm9 = vcmask 1048512
    %10 = vst.msk [vmem:[#allocation0] sm:$0x1] %vm9, %v8
    %s11 = scalar_lea.vmem %s0, 14
    %v12 = vld [vmem:[%s11] sm:$0x1]
    %13 = vrot.lane.b32.xlu0 %v12, 112
    %v14 = vpop.permute.xlu0 %13
    %vm15 = vcmask 982912
    %16 = vst.msk [vmem:[#allocation0] sm:$0x1] %vm15, %v14
    %s17 = scalar_lea.vmem %s0, 13
    %v18 = vld [vmem:[%s17] sm:$0x1]
    %19 = vrot.lane.b32.xlu0 %v18, 104
    %v20 = vpop.permute.xlu0 %19
    %vm21 = vcmask 917312
    %22 = vst.msk [vmem:[#allocation0] sm:$0x1] %vm21, %v20
    %s23 = scalar_lea.vmem %s0, 12
    %v24 = vld [vmem:[%s23] sm:$0x1]
    %25 = vrot.lane.b32.xlu0 %v24, 96
    %v26 = vpop.permute.xlu0 %25
    %vm27 = vcmask 851712
    %28 = vst.msk [vmem:[#allocation0] sm:$0x1] %vm27, %v26
    %s29 = scalar_lea.vmem %s0, 11
    %v30 = vld [vmem:[%s29] sm:$0x1]
    %31 = vrot.lane.b32.xlu0 %v30, 88
    %v32 = vpop.permute.xlu0 %31
    %vm33 = vcmask 786112
    %34 = vst.msk [vmem:[#allocation0] sm:$0x1] %vm33, %v32
    %s35 = scalar_lea.vmem %s0, 10
    %v36 = vld [vmem:[%s35] sm:$0x1]
    %37 = vrot.lane.b32.xlu0 %v36, 80
    %v38 = vpop.permute.xlu0 %37
    %vm39 = vcmask 720512
    %40 = vst.msk [vmem:[#allocation0] sm:$0x1] %vm39, %v38
    %s41 = scalar_lea.vmem %s0, 9
    %v42 = vld [vmem:[%s41] sm:$0x1]
    %43 = vrot.lane.b32.xlu0 %v42, 72
    %v44 = vpop.permute.xlu0 %43
    %vm45 = vcmask 654912
    %46 = vst.msk [vmem:[#allocation0] sm:$0x1] %vm45, %v44
    %s47 = scalar_lea.vmem %s0, 8
    %v48 = vld [vmem:[%s47] sm:$0x1]
    %49 = vrot.lane.b32.xlu0 %v48, 64
    %v50 = vpop.permute.xlu0 %49
    %vm51 = vcmask 589312
    %52 = vst.msk [vmem:[#allocation0] sm:$0x1] %vm51, %v50
    %s53 = scalar_lea.vmem %s0, 7
    %v54 = vld [vmem:[%s53] sm:$0x1]
    %55 = vrot.lane.b32.xlu0 %v54, 56
    %v56 = vpop.permute.xlu0 %55
    %vm57 = vcmask 523712
    %58 = vst.msk [vmem:[#allocation0] sm:$0x1] %vm57, %v56
    %s59 = scalar_lea.vmem %s0, 6
    %v60 = vld [vmem:[%s59] sm:$0x1]
    %61 = vrot.lane.b32.xlu0 %v60, 48
    %v62 = vpop.permute.xlu0 %61
    %vm63 = vcmask 458112
    %64 = vst.msk [vmem:[#allocation0] sm:$0x1] %vm63, %v62
    %s65 = scalar_lea.vmem %s0, 5
    %v66 = vld [vmem:[%s65] sm:$0x1]
    %67 = vrot.lane.b32.xlu0 %v66, 40
    %v68 = vpop.permute.xlu0 %67
    %vm69 = vcmask 392512
    %70 = vst.msk [vmem:[#allocation0] sm:$0x1] %vm69, %v68
    %s71 = scalar_lea.vmem %s0, 4
    %v72 = vld [vmem:[%s71] sm:$0x1]
    %73 = vrot.lane.b32.xlu0 %v72, 32
    %v74 = vpop.permute.xlu0 %73
    %vm75 = vcmask 326912
    %76 = vst.msk [vmem:[#allocation0] sm:$0x1] %vm75, %v74
    %s77 = scalar_lea.vmem %s0, 3
    %v78 = vld [vmem:[%s77] sm:$0x1]
    %79 = vrot.lane.b32.xlu0 %v78, 24
    %v80 = vpop.permute.xlu0 %79
    %vm81 = vcmask 261312
    %82 = vst.msk [vmem:[#allocation0] sm:$0x1] %vm81, %v80
    %s83 = scalar_lea.vmem %s0, 2
    %v84 = vld [vmem:[%s83] sm:$0x1]
    %85 = vrot.lane.b32.xlu0 %v84, 16
    %v86 = vpop.permute.xlu0 %85
    %vm87 = vcmask 195712
    %88 = vst.msk [vmem:[#allocation0] sm:$0x1] %vm87, %v86
    %s89 = scalar_lea.vmem %s0, 1
    %v90 = vld [vmem:[%s89] sm:$0x1]
    %91 = vrot.lane.b32.xlu0 %v90, 8
    %v92 = vpop.permute.xlu0 %91
    %vm93 = vcmask 130112
    %94 = vst.msk [vmem:[#allocation0] sm:$0x1] %vm93, %v92
    %s96 = sshll.u32 1, 1
    %s97 = ssub.s32 %s96, 1
    %v99 = vld [vmem:[#allocation0] sm:%s97]
    %s100 = sshll.u32 1, 1
    %s101 = ssub.s32 %s100, 1
    %102 = vst [vmem:[%s1] sm:%s101] %v99

// kernel: basic_block_forward.3
$region0: #{basic_block_forward.3}
  #allocation0 [shape = 'u32[]', space=smem, size = 0x4, offset = 0x4, fixed_abs, tag = 'smem constant byte address 0x4 - core index']
  #allocation1 [shape = 'u32[144,128]{1,0:T(1,128)}', space=vmem, size = 0x12000, scoped, tag = 'internal scratch']
  #allocation2 [shape = 'f32[18,128]{1,0:T(8,128)}', space=vmem, size = 0x3000, scoped, tag = 'scratch operand']
  %s0 = inlined_call_operand.vmem [shape: f32[2,16,128], index: 0, kind: input, shape index: {}]
  %s1 = inlined_call_operand.vmem [shape: f32[3,128,128], index: 1, kind: input, shape index: {}]
  %s2 = inlined_call_operand.vmem [shape: f32[2,16,128], index: 2, kind: output, shape index: {0}]
  %s3 = inlined_call_operand.vmem [shape: f32[2,2,128], index: 3, kind: output, shape index: {1}]
  %4 = xla_tuple %s2, %s3
  %s5 = sld [smem:[#allocation0]]
  $region49: #{basic_block_forward.3} parent=0
    _
  %s7 = ssub.s32 1, %s5
  %s8 = scalar_select 0, %s7, %s5
  loop: start=0, step=1, limit=4
  $region2: #{basic_block_forward.3} parent=0 // loop_pre_header
    _
  $region3: #{basic_block_forward.3} parent=0 // loop_header
    %s10 = sphi 0, %s14
    %p11 = scmp.ge.s32.totalorder %s10, 4
    %s20 = sphi 0, %s22
    %s23 = sphi 0, %s20
    %s24 = sphi 0, %s23
    %s40 = sphi 0, %s24
    %s44 = sphi 0, %s44
    %s46 = sphi 0, %s44
    %s47 = sphi 0, %s46
    %s61 = sphi 0, %s47
    %s67 = sphi 0, %s69
    %s70 = sphi 0, %s67
    %s71 = sphi 0, %s70
    %s87 = sphi 0, %s71
    %s93 = sphi 0, %s95
    %s96 = sphi 0, %s93
    %s97 = sphi 0, %s96
    %s113 = sphi 0, %s97
  $region4: #{basic_block_forward.3} parent=0 // loop_header_branch
    %13 = sbr.rel (%p11) target = $region8
  $region5: #{basic_block_forward.3} parent=0 // loop_body
    %s15 = ssub.s32 %s10, 1
    %s16 = ssub.s32 %s10, 2
    %s17 = sadd.s32 %s10, 1
    %s18 = ssub.s32 %s10, %s17
    %p19 = scmp.eq.s32.totalorder %s18, 0
    %s21 = sadd.s32 %s20, 1
    %s22 = scalar_select %p19, %s20, %s21
    %p25 = pneg %p19
    %p26 = scmp.eq.s32.totalorder %s10, 1
    %p27 = por %p25, %p26
    %p28 = scmp.ne.s32.totalorder %s20, %s23
    %p29 = scmp.eq.s32.totalorder %s10, 0
    %p30 = por %p28, %p29
    %p31 = scmp.ne.s32.totalorder %s20, %s23
    %p32 = scmp.eq.s32.totalorder %s15, 1
    %p33 = por %p31, %p32
    %p34 = scmp.ne.s32.totalorder %s23, %s24
    %p35 = scmp.eq.s32.totalorder %s15, 0
    %p36 = por %p34, %p35
    %p37 = scmp.ne.s32.totalorder %s23, %s24
    %p38 = scmp.eq.s32.totalorder %s16, 1
    %p39 = por %p37, %p38
    %p41 = scmp.ne.s32.totalorder %s24, %s40
    %p42 = scmp.eq.s32.totalorder %s16, 0
    %p43 = por %p41, %p42
    %s45 = sadd.s32 %s44, 1
    %p48 = scmp.eq.s32.totalorder %s10, 1
    %p49 = scmp.ne.s32.totalorder %s44, %s46
    %p50 = scmp.eq.s32.totalorder %s10, 0
    %p51 = por %p49, %p50
    %p52 = scmp.ne.s32.totalorder %s44, %s46
    %p53 = scmp.eq.s32.totalorder %s15, 1
    %p54 = por %p52, %p53
    %p55 = scmp.ne.s32.totalorder %s46, %s47
    %p56 = scmp.eq.s32.totalorder %s15, 0
    %p57 = por %p55, %p56
    %p58 = scmp.ne.s32.totalorder %s46, %s47
    %p59 = scmp.eq.s32.totalorder %s16, 1
    %p60 = por %p58, %p59
    %p62 = scmp.ne.s32.totalorder %s47, %s61
    %p63 = scmp.eq.s32.totalorder %s16, 0
    %p64 = por %p62, %p63
    %s65 = ssub.s32 %s10, %s17
    %p66 = scmp.eq.s32.totalorder %s65, 0
    %s68 = sadd.s32 %s67, 1
    %s69 = scalar_select %p66, %s67, %s68
    %p72 = pneg %p66
    %p73 = scmp.eq.s32.totalorder %s10, 1
    %p74 = por %p72, %p73
    %p75 = scmp.ne.s32.totalorder %s67, %s70
    %p76 = scmp.eq.s32.totalorder %s10, 0
    %p77 = por %p75, %p76
    %p78 = scmp.ne.s32.totalorder %s67, %s70
    %p79 = scmp.eq.s32.totalorder %s15, 1
    %p80 = por %p78, %p79
    %p81 = scmp.ne.s32.totalorder %s70, %s71
    %p82 = scmp.eq.s32.totalorder %s15, 0
    %p83 = por %p81, %p82
    %p84 = scmp.ne.s32.totalorder %s70, %s71
    %p85 = scmp.eq.s32.totalorder %s16, 1
    %p86 = por %p84, %p85
    %p88 = scmp.ne.s32.totalorder %s71, %s87
    %p89 = scmp.eq.s32.totalorder %s16, 0
    %p90 = por %p88, %p89
    %s91 = ssub.s32 %s10, %s17
    %p92 = scmp.eq.s32.totalorder %s91, 0
    %s94 = sadd.s32 %s93, 1
    %s95 = scalar_select %p92, %s93, %s94
    %p98 = pneg %p92
    %p99 = scmp.eq.s32.totalorder %s10, 1
    %p100 = por %p98, %p99
    %p101 = scmp.ne.s32.totalorder %s93, %s96
    %p102 = scmp.eq.s32.totalorder %s10, 0
    %p103 = por %p101, %p102
    %p104 = scmp.ne.s32.totalorder %s93, %s96
    %p105 = scmp.eq.s32.totalorder %s15, 1
    %p106 = por %p104, %p105
    %p107 = scmp.ne.s32.totalorder %s96, %s97
    %p108 = scmp.eq.s32.totalorder %s15, 0
    %p109 = por %p107, %p108
    %p110 = scmp.ne.s32.totalorder %s96, %s97
    %p111 = scmp.eq.s32.totalorder %s16, 1
    %p112 = por %p110, %p111
    %p114 = scmp.ne.s32.totalorder %s97, %s113
    %p115 = scmp.eq.s32.totalorder %s16, 0
    %p116 = por %p114, %p115
    %p117 = scmp.le.s32.totalorder 1, %s10
    %p118 = scmp.lt.s32.totalorder %s10, 3
    %p119 = pnand %p117, %p118
    %p120 = pneg %p119
    // Predicated region
    $region9: #{basic_block_forward.3} parent=5 // pred_check
      _
    $region10: #{basic_block_forward.3} parent=5 // pred_check_branch
      %122 = sbr.rel (%p119) target = $region12
    $region11: #{basic_block_forward.3} parent=5 // pred_region
      %s123 = ssub.s32 %s10, 1
      // Predicated region
      $region13: #{basic_block_forward.3} parent=11 // pred_check
        %p124 = pneg %p57
      $region14: #{basic_block_forward.3} parent=11 // pred_check_branch
        %126 = sbr.rel (%p124) target = $region16
      $region15: #{basic_block_forward.3} parent=11 // pred_region
        _
      $region16: #{basic_block_forward.3} parent=11 // pred_fallthru
        _
    $region12: #{basic_block_forward.3} parent=5 // pred_fallthru
      _
    %p127 = scmp.lt.s32.totalorder %s10, 2
    // Predicated region
    $region17: #{basic_block_forward.3} parent=5 // pred_check
      %p128 = pneg %p127
    $region18: #{basic_block_forward.3} parent=5 // pred_check_branch
      %130 = sbr.rel (%p128) target = $region20
    $region19: #{basic_block_forward.3} parent=5 // pred_region
      // Predicated region
      $region21: #{basic_block_forward.3} parent=19 // pred_check
        %p131 = pneg %p30
      $region22: #{basic_block_forward.3} parent=19 // pred_check_branch
        %133 = sbr.rel (%p131) target = $region24
      $region23: #{basic_block_forward.3} parent=19 // pred_region
        %p134 = scmp.lt.s32.totalorder %s10, 1
        %s135 = scalar_select %p134, %s10, 1
        %s136 = smul.addr %s135, 2
        %s137 = smul.addr %s136, 8
        %s138 = scalar_lea.vmem %s0, %s137
      $region24: #{basic_block_forward.3} parent=19 // pred_fallthru
        _
    $region20: #{basic_block_forward.3} parent=5 // pred_fallthru
      _
    %p139 = scmp.le.s32.totalorder 1, %s10
    %p140 = scmp.lt.s32.totalorder %s10, 3
    %p141 = pnand %p139, %p140
    %p142 = pneg %p141
    // Predicated region
    $region25: #{basic_block_forward.3} parent=5 // pred_check
      _
    $region26: #{basic_block_forward.3} parent=5 // pred_check_branch
      %144 = sbr.rel (%p141) target = $region28
    $region27: #{basic_block_forward.3} parent=5 // pred_region
      %s145 = ssub.s32 %s10, 1
      %p146 = scmp.lt.s32.totalorder %s15, 1
      %s147 = scalar_select %p146, %s15, 1
      %s148 = smul.addr %s147, 2
      %s149 = smul.addr %s148, 8
      %s150 = scalar_lea.vmem %s0, %s149
      %p151 = pneg %p36
      %p152 = pneg %p33
      %p153 = pneg %p57
      %p154 = pneg %p54
      %p155 = pneg %p83
      %p156 = pneg %p80
      %p157 = scmp.lt.s32.totalorder %s15, 1
      %s158 = scalar_select %p157, %s15, 1
      %s159 = smul.addr %s158, 2
      %s160 = smul.addr %s159, 8
      %s161 = scalar_lea.vmem %s2, %s160
      %p162 = pneg %p109
      %p163 = pneg %p106
      %p164 = scmp.lt.s32.totalorder %s15, 1
      %s165 = scalar_select %p164, %s15, 1
      %s166 = smul.addr %s165, 2
      %s167 = scalar_lea.vmem %s3, %s166
      %p168 = scmp.lt.s32.totalorder %s15, 1
      %s169 = scalar_select %p168, %s15, 1
      %s170 = smul.addr %s169, 2
      %s171 = smul.addr %s170, 8
      %s172 = scalar_lea.vmem %s0, %s171
      %p173 = scmp.lt.s32.totalorder %s15, 1
      %s174 = scalar_select %p173, %s15, 1
      %s175 = smul.addr %s174, 2
      %s176 = smul.addr %s175, 8
      %s177 = scalar_lea.vmem %s2, %s176
      %p178 = scmp.lt.s32.totalorder %s15, 1
      %s179 = scalar_select %p178, %s15, 1
      %s180 = smul.addr %s179, 2
      %s181 = scalar_lea.vmem %s3, %s180
      %182 = vst [vmem:[#allocation2] sm:$0x1] 0.0
      %183 = vst [vmem:[#allocation2 + $0x11] sm:$0x1] 0.0
      %v184 = vld [vmem:[%s172] sm:$0xff]
      %v185 = vld [vmem:[%s172 + $0x8] sm:$0xff]
      %186 = vst [vmem:[#allocation2 + $0x1] sm:$0xff] %v184
      %187 = vst [vmem:[#allocation2 + $0x9] sm:$0xff] %v185
      %v188 = vld [vmem:[#allocation2] sm:$0xff]
      %v189 = vld [vmem:[#allocation2 + $0x8] sm:$0xff]
      %v190 = vld [vmem:[%s1] sm:$0xff]
      %v191 = vld [vmem:[%s1 + $0x8] sm:$0xff]
      %v192 = vld [vmem:[%s1 + $0x10] sm:$0xff]
      %v193 = vld [vmem:[%s1 + $0x18] sm:$0xff]
      %v194 = vld [vmem:[%s1 + $0x20] sm:$0xff]
      %v195 = vld [vmem:[%s1 + $0x28] sm:$0xff]
      %v196 = vld [vmem:[%s1 + $0x30] sm:$0xff]
      %v197 = vld [vmem:[%s1 + $0x38] sm:$0xff]
      %v198 = vld [vmem:[%s1 + $0x40] sm:$0xff]
      %v199 = vld [vmem:[%s1 + $0x48] sm:$0xff]
      %v200 = vld [vmem:[%s1 + $0x50] sm:$0xff]
      %v201 = vld [vmem:[%s1 + $0x58] sm:$0xff]
      %v202 = vld [vmem:[%s1 + $0x60] sm:$0xff]
      %v203 = vld [vmem:[%s1 + $0x68] sm:$0xff]
      %v204 = vld [vmem:[%s1 + $0x70] sm:$0xff]
      %v205 = vld [vmem:[%s1 + $0x78] sm:$0xff]
      %v206 = vld [vmem:[#allocation2 + $0x1] sm:$0xff]
      %v207 = vld [vmem:[#allocation2 + $0x9] sm:$0xff]
      %s208 = scalar_lea.vmem %s1, 128
      %v209 = vld [vmem:[%s208] sm:$0xff]
      %v210 = vld [vmem:[%s208 + $0x8] sm:$0xff]
      %v211 = vld [vmem:[%s208 + $0x10] sm:$0xff]
      %v212 = vld [vmem:[%s208 + $0x18] sm:$0xff]
      %v213 = vld [vmem:[%s208 + $0x20] sm:$0xff]
      %v214 = vld [vmem:[%s208 + $0x28] sm:$0xff]
      %v215 = vld [vmem:[%s208 + $0x30] sm:$0xff]
      %v216 = vld [vmem:[%s208 + $0x38] sm:$0xff]
      %v217 = vld [vmem:[%s208 + $0x40] sm:$0xff]
      %v218 = vld [vmem:[%s208 + $0x48] sm:$0xff]
      %v219 = vld [vmem:[%s208 + $0x50] sm:$0xff]
      %v220 = vld [vmem:[%s208 + $0x58] sm:$0xff]
      %v221 = vld [vmem:[%s208 + $0x60] sm:$0xff]
      %v222 = vld [vmem:[%s208 + $0x68] sm:$0xff]
      %v223 = vld [vmem:[%s208 + $0x70] sm:$0xff]
      %v224 = vld [vmem:[%s208 + $0x78] sm:$0xff]
      %225 = vmatprep.subr.mxu0 0.0
      %226 = vmatpush1.msra.mxu0 %v224
      %227 = vmatprep.subr.mxu0 0.0
      %228 = vmatpush1.msra.mxu0 %v223
      %229 = vmatprep.subr.mxu0 0.0
      %230 = vmatpush1.msra.mxu0 %v222
      %231 = vmatprep.subr.mxu0 0.0
      %232 = vmatpush1.msra.mxu0 %v221
      %233 = vmatprep.subr.mxu0 0.0
      %234 = vmatpush1.msra.mxu0 %v220
      %235 = vmatprep.subr.mxu0 0.0
      %236 = vmatpush1.msra.mxu0 %v219
      %237 = vmatprep.subr.mxu0 0.0
      %238 = vmatpush1.msra.mxu0 %v218
      %239 = vmatprep.subr.mxu0 0.0
      %240 = vmatpush1.msra.mxu0 %v217
      %241 = vmatprep.subr.mxu0 0.0
      %242 = vmatpush1.msra.mxu0 %v216
      %243 = vmatprep.subr.mxu0 0.0
      %244 = vmatpush1.msra.mxu0 %v215
      %245 = vmatprep.subr.mxu0 0.0
      %246 = vmatpush1.msra.mxu0 %v214
      %247 = vmatprep.subr.mxu0 0.0
      %248 = vmatpush1.msra.mxu0 %v213
      %249 = vmatprep.subr.mxu0 0.0
      %250 = vmatpush1.msra.mxu0 %v212
      %251 = vmatprep.subr.mxu0 0.0
      %252 = vmatpush1.msra.mxu0 %v211
      %253 = vmatprep.subr.mxu0 0.0
      %254 = vmatpush1.msra.mxu0 %v210
      %255 = vmatprep.subr.mxu0 0.0
      %256 = vmatpush1.msra.mxu0 %v209
      %257 = vmatprep.subr.mxu0 0.0
      %258 = vmatpush2.msra.mxu0 0.0
      %259 = vmatprep.subr.mxu0 0.0
      %260 = vmatpush2.msra.mxu0 0.0
      %261 = vmatprep.subr.mxu0 0.0
      %262 = vmatpush2.msra.mxu0 0.0
      %263 = vmatprep.subr.mxu0 0.0
      %264 = vmatpush2.msra.mxu0 0.0
      %265 = vmatprep.subr.mxu0 0.0
      %266 = vmatpush2.msra.mxu0 0.0
      %267 = vmatprep.subr.mxu0 0.0
      %268 = vmatpush2.msra.mxu0 0.0
      %269 = vmatprep.subr.mxu0 0.0
      %270 = vmatpush2.msra.mxu0 0.0
      %271 = vmatprep.subr.mxu0 0.0
      %272 = vmatpush2.msra.mxu0 0.0
      %273 = vmatprep.subr.mxu0 0.0
      %274 = vmatpush2.msra.mxu0 0.0
      %275 = vmatprep.subr.mxu0 0.0
      %276 = vmatpush2.msra.mxu0 0.0
      %277 = vmatprep.subr.mxu0 0.0
      %278 = vmatpush2.msra.mxu0 0.0
      %279 = vmatprep.subr.mxu0 0.0
      %280 = vmatpush2.msra.mxu0 0.0
      %281 = vmatprep.subr.mxu0 0.0
      %282 = vmatpush2.msra.mxu0 0.0
      %283 = vmatprep.subr.mxu0 0.0
      %284 = vmatpush2.msra.mxu0 0.0
      %285 = vmatprep.subr.mxu0 0.0
      %286 = vmatpush2.msra.mxu0 0.0
      %287 = vmatprep.subr.mxu0 0.0
      %288 = vmatpush2.msra.mxu0 0.0
      %289 = vmatprep.mubr.f32.mxu0 0.0
      %290 = vmatmul.mubr.f32.gmra.mxu0 %v206
      %v291 = vpop.f32.mrf.mxu0
      %v292 = vadd.f32 0.0, %v291
      %v293 = vpop.f32.mrf.mxu0
      %294 = vmatprep.mubr.f32.mxu0 0.0
      %295 = vmatmul.mubr.f32.gmra.mxu0 %v207
      %v296 = vpop.f32.mrf.mxu0
      %v297 = vadd.f32 0.0, %v296
      %v298 = vpop.f32.mrf.mxu0
      %299 = vdwg.mxu0
      %300 = vmatprep.subr.mxu0 0.0
      %301 = vmatpush1.msra.mxu0 %v205
      %302 = vmatprep.subr.mxu0 0.0
      %303 = vmatpush1.msra.mxu0 %v204
      %304 = vmatprep.subr.mxu0 0.0
      %305 = vmatpush1.msra.mxu0 %v203
      %306 = vmatprep.subr.mxu0 0.0
      %307 = vmatpush1.msra.mxu0 %v202
      %308 = vmatprep.subr.mxu0 0.0
      %309 = vmatpush1.msra.mxu0 %v201
      %310 = vmatprep.subr.mxu0 0.0
      %311 = vmatpush1.msra.mxu0 %v200
      %312 = vmatprep.subr.mxu0 0.0
      %313 = vmatpush1.msra.mxu0 %v199
      %314 = vmatprep.subr.mxu0 0.0
      %315 = vmatpush1.msra.mxu0 %v198
      %316 = vmatprep.subr.mxu0 0.0
      %317 = vmatpush1.msra.mxu0 %v197
      %318 = vmatprep.subr.mxu0 0.0
      %319 = vmatpush1.msra.mxu0 %v196
      %320 = vmatprep.subr.mxu0 0.0
      %321 = vmatpush1.msra.mxu0 %v195
      %322 = vmatprep.subr.mxu0 0.0
      %323 = vmatpush1.msra.mxu0 %v194
      %324 = vmatprep.subr.mxu0 0.0
      %325 = vmatpush1.msra.mxu0 %v193
      %326 = vmatprep.subr.mxu0 0.0
      %327 = vmatpush1.msra.mxu0 %v192
      %328 = vmatprep.subr.mxu0 0.0
      %329 = vmatpush1.msra.mxu0 %v191
      %330 = vmatprep.subr.mxu0 0.0
      %331 = vmatpush1.msra.mxu0 %v190
      %332 = vmatprep.subr.mxu0 0.0
      %333 = vmatpush2.msra.mxu0 0.0
      %334 = vmatprep.subr.mxu0 0.0
      %335 = vmatpush2.msra.mxu0 0.0
      %336 = vmatprep.subr.mxu0 0.0
      %337 = vmatpush2.msra.mxu0 0.0
      %338 = vmatprep.subr.mxu0 0.0
      %339 = vmatpush2.msra.mxu0 0.0
      %340 = vmatprep.subr.mxu0 0.0
      %341 = vmatpush2.msra.mxu0 0.0
      %342 = vmatprep.subr.mxu0 0.0
      %343 = vmatpush2.msra.mxu0 0.0
      %344 = vmatprep.subr.mxu0 0.0
      %345 = vmatpush2.msra.mxu0 0.0
      %346 = vmatprep.subr.mxu0 0.0
      %347 = vmatpush2.msra.mxu0 0.0
      %348 = vmatprep.subr.mxu0 0.0
      %349 = vmatpush2.msra.mxu0 0.0
      %350 = vmatprep.subr.mxu0 0.0
      %351 = vmatpush2.msra.mxu0 0.0
      %352 = vmatprep.subr.mxu0 0.0
      %353 = vmatpush2.msra.mxu0 0.0
      %354 = vmatprep.subr.mxu0 0.0
      %355 = vmatpush2.msra.mxu0 0.0
      %356 = vmatprep.subr.mxu0 0.0
      %357 = vmatpush2.msra.mxu0 0.0
      %358 = vmatprep.subr.mxu0 0.0
      %359 = vmatpush2.msra.mxu0 0.0
      %360 = vmatprep.subr.mxu0 0.0
      %361 = vmatpush2.msra.mxu0 0.0
      %362 = vmatprep.subr.mxu0 0.0
      %363 = vmatpush2.msra.mxu0 0.0
      %364 = vmatprep.mubr.f32.mxu0 0.0
      %365 = vmatmul.mubr.f32.gmra.mxu0 %v188
      %v366 = vpop.f32.mrf.mxu0
      %v367 = vadd.f32 %v292, %v366
      %v368 = vpop.f32.mrf.mxu0
      %369 = vmatprep.mubr.f32.mxu0 0.0
      %370 = vmatmul.mubr.f32.gmra.mxu0 %v189
      %v371 = vpop.f32.mrf.mxu0
      %v372 = vadd.f32 %v297, %v371
      %v373 = vpop.f32.mrf.mxu0
      %374 = vdwg.mxu0
      %v375 = vld [vmem:[#allocation2 + $0x2] sm:$0xff]
      %v376 = vld [vmem:[#allocation2 + $0xa] sm:$0xff]
      %s377 = scalar_lea.vmem %s1, 256
      %v378 = vld [vmem:[%s377] sm:$0xff]
      %v379 = vld [vmem:[%s377 + $0x8] sm:$0xff]
      %v380 = vld [vmem:[%s377 + $0x10] sm:$0xff]
      %v381 = vld [vmem:[%s377 + $0x18] sm:$0xff]
      %v382 = vld [vmem:[%s377 + $0x20] sm:$0xff]
      %v383 = vld [vmem:[%s377 + $0x28] sm:$0xff]
      %v384 = vld [vmem:[%s377 + $0x30] sm:$0xff]
      %v385 = vld [vmem:[%s377 + $0x38] sm:$0xff]
      %v386 = vld [vmem:[%s377 + $0x40] sm:$0xff]
      %v387 = vld [vmem:[%s377 + $0x48] sm:$0xff]
      %v388 = vld [vmem:[%s377 + $0x50] sm:$0xff]
      %v389 = vld [vmem:[%s377 + $0x58] sm:$0xff]
      %v390 = vld [vmem:[%s377 + $0x60] sm:$0xff]
      %v391 = vld [vmem:[%s377 + $0x68] sm:$0xff]
      %v392 = vld [vmem:[%s377 + $0x70] sm:$0xff]
      %v393 = vld [vmem:[%s377 + $0x78] sm:$0xff]
      %394 = vmatprep.subr.mxu0 0.0
      %395 = vmatpush1.msra.mxu0 %v393
      %396 = vmatprep.subr.mxu0 0.0
      %397 = vmatpush1.msra.mxu0 %v392
      %398 = vmatprep.subr.mxu0 0.0
      %399 = vmatpush1.msra.mxu0 %v391
      %400 = vmatprep.subr.mxu0 0.0
      %401 = vmatpush1.msra.mxu0 %v390
      %402 = vmatprep.subr.mxu0 0.0
      %403 = vmatpush1.msra.mxu0 %v389
      %404 = vmatprep.subr.mxu0 0.0
      %405 = vmatpush1.msra.mxu0 %v388
      %406 = vmatprep.subr.mxu0 0.0
      %407 = vmatpush1.msra.mxu0 %v387
      %408 = vmatprep.subr.mxu0 0.0
      %409 = vmatpush1.msra.mxu0 %v386
      %410 = vmatprep.subr.mxu0 0.0
      %411 = vmatpush1.msra.mxu0 %v385
      %412 = vmatprep.subr.mxu0 0.0
      %413 = vmatpush1.msra.mxu0 %v384
      %414 = vmatprep.subr.mxu0 0.0
      %415 = vmatpush1.msra.mxu0 %v383
      %416 = vmatprep.subr.mxu0 0.0
      %417 = vmatpush1.msra.mxu0 %v382
      %418 = vmatprep.subr.mxu0 0.0
      %419 = vmatpush1.msra.mxu0 %v381
      %420 = vmatprep.subr.mxu0 0.0
      %421 = vmatpush1.msra.mxu0 %v380
      %422 = vmatprep.subr.mxu0 0.0
      %423 = vmatpush1.msra.mxu0 %v379
      %424 = vmatprep.subr.mxu0 0.0
      %425 = vmatpush1.msra.mxu0 %v378
      %426 = vmatprep.subr.mxu0 0.0
      %427 = vmatpush2.msra.mxu0 0.0
      %428 = vmatprep.subr.mxu0 0.0
      %429 = vmatpush2.msra.mxu0 0.0
      %430 = vmatprep.subr.mxu0 0.0
      %431 = vmatpush2.msra.mxu0 0.0
      %432 = vmatprep.subr.mxu0 0.0
      %433 = vmatpush2.msra.mxu0 0.0
      %434 = vmatprep.subr.mxu0 0.0
      %435 = vmatpush2.msra.mxu0 0.0
      %436 = vmatprep.subr.mxu0 0.0
      %437 = vmatpush2.msra.mxu0 0.0
      %438 = vmatprep.subr.mxu0 0.0
      %439 = vmatpush2.msra.mxu0 0.0
      %440 = vmatprep.subr.mxu0 0.0
      %441 = vmatpush2.msra.mxu0 0.0
      %442 = vmatprep.subr.mxu0 0.0
      %443 = vmatpush2.msra.mxu0 0.0
      %444 = vmatprep.subr.mxu0 0.0
      %445 = vmatpush2.msra.mxu0 0.0
      %446 = vmatprep.subr.mxu0 0.0
      %447 = vmatpush2.msra.mxu0 0.0
      %448 = vmatprep.subr.mxu0 0.0
      %449 = vmatpush2.msra.mxu0 0.0
      %450 = vmatprep.subr.mxu0 0.0
      %451 = vmatpush2.msra.mxu0 0.0
      %452 = vmatprep.subr.mxu0 0.0
      %453 = vmatpush2.msra.mxu0 0.0
      %454 = vmatprep.subr.mxu0 0.0
      %455 = vmatpush2.msra.mxu0 0.0
      %456 = vmatprep.subr.mxu0 0.0
      %457 = vmatpush2.msra.mxu0 0.0
      %458 = vmatprep.mubr.f32.mxu0 0.0
      %459 = vmatmul.mubr.f32.gmra.mxu0 %v375
      %v460 = vpop.f32.mrf.mxu0
      %v461 = vadd.f32 0.0, %v460
      %v462 = vpop.f32.mrf.mxu0
      %463 = vmatprep.mubr.f32.mxu0 0.0
      %464 = vmatmul.mubr.f32.gmra.mxu0 %v376
      %v465 = vpop.f32.mrf.mxu0
      %v466 = vadd.f32 0.0, %v465
      %v467 = vpop.f32.mrf.mxu0
      %468 = vdwg.mxu0
      %v469 = vadd.f32 %v367, %v461
      %v470 = vadd.f32 %v372, %v466
      %471 = vst [vmem:[%s177] sm:$0xff] %v469
      %472 = vst [vmem:[%s177 + $0x8] sm:$0xff] %v470
      %v473 = vadd.f32 %v469, %v470
      %v474 = vrot.slane %v473, 4
      %v475 = vadd.f32 %v473, %v474
      %v476 = vrot.slane %v475, 2
      %v477 = vadd.f32 %v475, %v476
      %v478 = vrot.slane %v477, 1
      %v479 = vadd.f32 %v477, %v478
      %v480 = vmul.f32 %v469, %v469
      %v481 = vmul.f32 %v470, %v470
      %v482 = vadd.f32 %v480, %v481
      %v483 = vrot.slane %v482, 4
      %v484 = vadd.f32 %v482, %v483
      %v485 = vrot.slane %v484, 2
      %v486 = vadd.f32 %v484, %v485
      %v487 = vrot.slane %v486, 1
      %v488 = vadd.f32 %v486, %v487
      %vm489 = vcmask 1040384
      %v490 = vsel %vm489, %v479, %v488
      %491 = vst [vmem:[%s181] sm:$0x3] %v490
      %p492 = scmp.lt.s32.totalorder %s15, 1
      %s493 = scalar_select %p492, %s15, 1
      %s494 = smul.addr %s493, 2
      %s495 = smul.addr %s494, 8
      %s496 = scalar_lea.vmem %s2, %s495
      %p497 = scmp.lt.s32.totalorder %s15, 1
      %s498 = scalar_select %p497, %s15, 1
      %s499 = smul.addr %s498, 2
      %s500 = scalar_lea.vmem %s3, %s499
      // Predicated region
      $region29: #{basic_block_forward.3} parent=27 // pred_check
        %p501 = pneg %p80
      $region30: #{basic_block_forward.3} parent=27 // pred_check_branch
        %503 = sbr.rel (%p501) target = $region32
      $region31: #{basic_block_forward.3} parent=27 // pred_region
        _
      $region32: #{basic_block_forward.3} parent=27 // pred_fallthru
        _
      // Predicated region
      $region33: #{basic_block_forward.3} parent=27 // pred_check
        %p504 = pneg %p106
      $region34: #{basic_block_forward.3} parent=27 // pred_check_branch
        %506 = sbr.rel (%p504) target = $region36
      $region35: #{basic_block_forward.3} parent=27 // pred_region
        _
      $region36: #{basic_block_forward.3} parent=27 // pred_fallthru
        _
    $region28: #{basic_block_forward.3} parent=5 // pred_fallthru
      _
    %p507 = scmp.le.s32.totalorder 2, %s10
    // Predicated region
    $region37: #{basic_block_forward.3} parent=5 // pred_check
      %p508 = pneg %p507
    $region38: #{basic_block_forward.3} parent=5 // pred_check_branch
      %510 = sbr.rel (%p508) target = $region40
    $region39: #{basic_block_forward.3} parent=5 // pred_region
      %s511 = ssub.s32 %s10, 2
      // Predicated region
      $region41: #{basic_block_forward.3} parent=39 // pred_check
        %p512 = pneg %p86
      $region42: #{basic_block_forward.3} parent=39 // pred_check_branch
        %514 = sbr.rel (%p512) target = $region44
      $region43: #{basic_block_forward.3} parent=39 // pred_region
        %p515 = scmp.lt.s32.totalorder %s16, 1
        %s516 = scalar_select %p515, %s16, 1
        %s517 = smul.addr %s516, 2
        %s518 = smul.addr %s517, 8
        %s519 = scalar_lea.vmem %s2, %s518
      $region44: #{basic_block_forward.3} parent=39 // pred_fallthru
        _
      // Predicated region
      $region45: #{basic_block_forward.3} parent=39 // pred_check
        %p520 = pneg %p112
      $region46: #{basic_block_forward.3} parent=39 // pred_check_branch
        %522 = sbr.rel (%p520) target = $region48
      $region47: #{basic_block_forward.3} parent=39 // pred_region
        %p523 = scmp.lt.s32.totalorder %s16, 1
        %s524 = scalar_select %p523, %s16, 1
        %s525 = smul.addr %s524, 2
        %s526 = scalar_lea.vmem %s3, %s525
      $region48: #{basic_block_forward.3} parent=39 // pred_fallthru
        _
    $region40: #{basic_block_forward.3} parent=5 // pred_fallthru
      _
  $region6: #{basic_block_forward.3} parent=0 // loop_footer
    %s14 = sadd.s32 1, %s10
  $region7: #{basic_block_forward.3} parent=0 // loop_footer_branch
    %9 = sbr.rel target = $region3
  $region8: #{basic_block_forward.3} parent=0 // loop_exit
    _

// kernel: basic_block_forward.4
$region0: #{basic_block_forward.4}
  #allocation0 [shape = 'u32[]', space=smem, size = 0x4, offset = 0x4, fixed_abs, tag = 'smem constant byte address 0x4 - core index']
  #allocation1 [shape = 'u32[144,128]{1,0:T(1,128)}', space=vmem, size = 0x12000, scoped, tag = 'internal scratch']
  #allocation2 [shape = 'f32[18,128]{1,0:T(8,128)}', space=vmem, size = 0x3000, scoped, tag = 'scratch operand']
  %s0 = inlined_call_operand.vmem [shape: f32[2,16,128], index: 0, kind: input, shape index: {}]
  %s1 = inlined_call_operand.vmem [shape: f32[1,128], index: 1, kind: input, shape index: {}]
  %s2 = inlined_call_operand.vmem [shape: f32[1,128], index: 2, kind: input, shape index: {}]
  %s3 = inlined_call_operand.vmem [shape: f32[3,128,128], index: 3, kind: input, shape index: {}]
  %s4 = inlined_call_operand.vmem [shape: f32[2,16,128], index: 4, kind: output, shape index: {0}]
  %s5 = inlined_call_operand.vmem [shape: f32[2,2,128], index: 5, kind: output, shape index: {1}]
  %6 = xla_tuple %s4, %s5
  %s7 = sld [smem:[#allocation0]]
  $region57: #{basic_block_forward.4} parent=0
    _
  %s9 = ssub.s32 1, %s7
  %s10 = scalar_select 0, %s9, %s7
  loop: start=0, step=1, limit=4
  $region2: #{basic_block_forward.4} parent=0 // loop_pre_header
    _
  $region3: #{basic_block_forward.4} parent=0 // loop_header
    %s12 = sphi 0, %s16
    %p13 = scmp.ge.s32.totalorder %s12, 4
    %s22 = sphi 0, %s24
    %s25 = sphi 0, %s22
    %s26 = sphi 0, %s25
    %s42 = sphi 0, %s26
    %s46 = sphi 0, %s46
    %s48 = sphi 0, %s46
    %s49 = sphi 0, %s48
    %s63 = sphi 0, %s49
    %s67 = sphi 0, %s67
    %s69 = sphi 0, %s67
    %s70 = sphi 0, %s69
    %s84 = sphi 0, %s70
    %s88 = sphi 0, %s88
    %s90 = sphi 0, %s88
    %s91 = sphi 0, %s90
    %s105 = sphi 0, %s91
    %s111 = sphi 0, %s113
    %s114 = sphi 0, %s111
    %s115 = sphi 0, %s114
    %s131 = sphi 0, %s115
    %s137 = sphi 0, %s139
    %s140 = sphi 0, %s137
    %s141 = sphi 0, %s140
    %s157 = sphi 0, %s141
  $region4: #{basic_block_forward.4} parent=0 // loop_header_branch
    %15 = sbr.rel (%p13) target = $region8
  $region5: #{basic_block_forward.4} parent=0 // loop_body
    %s17 = ssub.s32 %s12, 1
    %s18 = ssub.s32 %s12, 2
    %s19 = sadd.s32 %s12, 1
    %s20 = ssub.s32 %s12, %s19
    %p21 = scmp.eq.s32.totalorder %s20, 0
    %s23 = sadd.s32 %s22, 1
    %s24 = scalar_select %p21, %s22, %s23
    %p27 = pneg %p21
    %p28 = scmp.eq.s32.totalorder %s12, 1
    %p29 = por %p27, %p28
    %p30 = scmp.ne.s32.totalorder %s22, %s25
    %p31 = scmp.eq.s32.totalorder %s12, 0
    %p32 = por %p30, %p31
    %p33 = scmp.ne.s32.totalorder %s22, %s25
    %p34 = scmp.eq.s32.totalorder %s17, 1
    %p35 = por %p33, %p34
    %p36 = scmp.ne.s32.totalorder %s25, %s26
    %p37 = scmp.eq.s32.totalorder %s17, 0
    %p38 = por %p36, %p37
    %p39 = scmp.ne.s32.totalorder %s25, %s26
    %p40 = scmp.eq.s32.totalorder %s18, 1
    %p41 = por %p39, %p40
    %p43 = scmp.ne.s32.totalorder %s26, %s42
    %p44 = scmp.eq.s32.totalorder %s18, 0
    %p45 = por %p43, %p44
    %s47 = sadd.s32 %s46, 1
    %p50 = scmp.eq.s32.totalorder %s12, 1
    %p51 = scmp.ne.s32.totalorder %s46, %s48
    %p52 = scmp.eq.s32.totalorder %s12, 0
    %p53 = por %p51, %p52
    %p54 = scmp.ne.s32.totalorder %s46, %s48
    %p55 = scmp.eq.s32.totalorder %s17, 1
    %p56 = por %p54, %p55
    %p57 = scmp.ne.s32.totalorder %s48, %s49
    %p58 = scmp.eq.s32.totalorder %s17, 0
    %p59 = por %p57, %p58
    %p60 = scmp.ne.s32.totalorder %s48, %s49
    %p61 = scmp.eq.s32.totalorder %s18, 1
    %p62 = por %p60, %p61
    %p64 = scmp.ne.s32.totalorder %s49, %s63
    %p65 = scmp.eq.s32.totalorder %s18, 0
    %p66 = por %p64, %p65
    %s68 = sadd.s32 %s67, 1
    %p71 = scmp.eq.s32.totalorder %s12, 1
    %p72 = scmp.ne.s32.totalorder %s67, %s69
    %p73 = scmp.eq.s32.totalorder %s12, 0
    %p74 = por %p72, %p73
    %p75 = scmp.ne.s32.totalorder %s67, %s69
    %p76 = scmp.eq.s32.totalorder %s17, 1
    %p77 = por %p75, %p76
    %p78 = scmp.ne.s32.totalorder %s69, %s70
    %p79 = scmp.eq.s32.totalorder %s17, 0
    %p80 = por %p78, %p79
    %p81 = scmp.ne.s32.totalorder %s69, %s70
    %p82 = scmp.eq.s32.totalorder %s18, 1
    %p83 = por %p81, %p82
    %p85 = scmp.ne.s32.totalorder %s70, %s84
    %p86 = scmp.eq.s32.totalorder %s18, 0
    %p87 = por %p85, %p86
    %s89 = sadd.s32 %s88, 1
    %p92 = scmp.eq.s32.totalorder %s12, 1
    %p93 = scmp.ne.s32.totalorder %s88, %s90
    %p94 = scmp.eq.s32.totalorder %s12, 0
    %p95 = por %p93, %p94
    %p96 = scmp.ne.s32.totalorder %s88, %s90
    %p97 = scmp.eq.s32.totalorder %s17, 1
    %p98 = por %p96, %p97
    %p99 = scmp.ne.s32.totalorder %s90, %s91
    %p100 = scmp.eq.s32.totalorder %s17, 0
    %p101 = por %p99, %p100
    %p102 = scmp.ne.s32.totalorder %s90, %s91
    %p103 = scmp.eq.s32.totalorder %s18, 1
    %p104 = por %p102, %p103
    %p106 = scmp.ne.s32.totalorder %s91, %s105
    %p107 = scmp.eq.s32.totalorder %s18, 0
    %p108 = por %p106, %p107
    %s109 = ssub.s32 %s12, %s19
    %p110 = scmp.eq.s32.totalorder %s109, 0
    %s112 = sadd.s32 %s111, 1
    %s113 = scalar_select %p110, %s111, %s112
    %p116 = pneg %p110
    %p117 = scmp.eq.s32.totalorder %s12, 1
    %p118 = por %p116, %p117
    %p119 = scmp.ne.s32.totalorder %s111, %s114
    %p120 = scmp.eq.s32.totalorder %s12, 0
    %p121 = por %p119, %p120
    %p122 = scmp.ne.s32.totalorder %s111, %s114
    %p123 = scmp.eq.s32.totalorder %s17, 1
    %p124 = por %p122, %p123
    %p125 = scmp.ne.s32.totalorder %s114, %s115
    %p126 = scmp.eq.s32.totalorder %s17, 0
    %p127 = por %p125, %p126
    %p128 = scmp.ne.s32.totalorder %s114, %s115
    %p129 = scmp.eq.s32.totalorder %s18, 1
    %p130 = por %p128, %p129
    %p132 = scmp.ne.s32.totalorder %s115, %s131
    %p133 = scmp.eq.s32.totalorder %s18, 0
    %p134 = por %p132, %p133
    %s135 = ssub.s32 %s12, %s19
    %p136 = scmp.eq.s32.totalorder %s135, 0
    %s138 = sadd.s32 %s137, 1
    %s139 = scalar_select %p136, %s137, %s138
    %p142 = pneg %p136
    %p143 = scmp.eq.s32.totalorder %s12, 1
    %p144 = por %p142, %p143
    %p145 = scmp.ne.s32.totalorder %s137, %s140
    %p146 = scmp.eq.s32.totalorder %s12, 0
    %p147 = por %p145, %p146
    %p148 = scmp.ne.s32.totalorder %s137, %s140
    %p149 = scmp.eq.s32.totalorder %s17, 1
    %p150 = por %p148, %p149
    %p151 = scmp.ne.s32.totalorder %s140, %s141
    %p152 = scmp.eq.s32.totalorder %s17, 0
    %p153 = por %p151, %p152
    %p154 = scmp.ne.s32.totalorder %s140, %s141
    %p155 = scmp.eq.s32.totalorder %s18, 1
    %p156 = por %p154, %p155
    %p158 = scmp.ne.s32.totalorder %s141, %s157
    %p159 = scmp.eq.s32.totalorder %s18, 0
    %p160 = por %p158, %p159
    %p161 = scmp.le.s32.totalorder 1, %s12
    %p162 = scmp.lt.s32.totalorder %s12, 3
    %p163 = pnand %p161, %p162
    %p164 = pneg %p163
    // Predicated region
    $region9: #{basic_block_forward.4} parent=5 // pred_check
      _
    $region10: #{basic_block_forward.4} parent=5 // pred_check_branch
      %166 = sbr.rel (%p163) target = $region12
    $region11: #{basic_block_forward.4} parent=5 // pred_region
      %s167 = ssub.s32 %s12, 1
      // Predicated region
      $region13: #{basic_block_forward.4} parent=11 // pred_check
        %p168 = pneg %p59
      $region14: #{basic_block_forward.4} parent=11 // pred_check_branch
        %170 = sbr.rel (%p168) target = $region16
      $region15: #{basic_block_forward.4} parent=11 // pred_region
        _
      $region16: #{basic_block_forward.4} parent=11 // pred_fallthru
        _
      // Predicated region
      $region17: #{basic_block_forward.4} parent=11 // pred_check
        %p171 = pneg %p80
      $region18: #{basic_block_forward.4} parent=11 // pred_check_branch
        %173 = sbr.rel (%p171) target = $region20
      $region19: #{basic_block_forward.4} parent=11 // pred_region
        _
      $region20: #{basic_block_forward.4} parent=11 // pred_fallthru
        _
      // Predicated region
      $region21: #{basic_block_forward.4} parent=11 // pred_check
        %p174 = pneg %p101
      $region22: #{basic_block_forward.4} parent=11 // pred_check_branch
        %176 = sbr.rel (%p174) target = $region24
      $region23: #{basic_block_forward.4} parent=11 // pred_region
        _
      $region24: #{basic_block_forward.4} parent=11 // pred_fallthru
        _
    $region12: #{basic_block_forward.4} parent=5 // pred_fallthru
      _
    %p177 = scmp.lt.s32.totalorder %s12, 2
    // Predicated region
    $region25: #{basic_block_forward.4} parent=5 // pred_check
      %p178 = pneg %p177
    $region26: #{basic_block_forward.4} parent=5 // pred_check_branch
      %180 = sbr.rel (%p178) target = $region28
    $region27: #{basic_block_forward.4} parent=5 // pred_region
      // Predicated region
      $region29: #{basic_block_forward.4} parent=27 // pred_check
        %p181 = pneg %p32
      $region30: #{basic_block_forward.4} parent=27 // pred_check_branch
        %183 = sbr.rel (%p181) target = $region32
      $region31: #{basic_block_forward.4} parent=27 // pred_region
        %p184 = scmp.lt.s32.totalorder %s12, 1
        %s185 = scalar_select %p184, %s12, 1
        %s186 = smul.addr %s185, 2
        %s187 = smul.addr %s186, 8
        %s188 = scalar_lea.vmem %s0, %s187
      $region32: #{basic_block_forward.4} parent=27 // pred_fallthru
        _
    $region28: #{basic_block_forward.4} parent=5 // pred_fallthru
      _
    %p189 = scmp.le.s32.totalorder 1, %s12
    %p190 = scmp.lt.s32.totalorder %s12, 3
    %p191 = pnand %p189, %p190
    %p192 = pneg %p191
    // Predicated region
    $region33: #{basic_block_forward.4} parent=5 // pred_check
      _
    $region34: #{basic_block_forward.4} parent=5 // pred_check_branch
      %194 = sbr.rel (%p191) target = $region36
    $region35: #{basic_block_forward.4} parent=5 // pred_region
      %s195 = ssub.s32 %s12, 1
      %p196 = scmp.lt.s32.totalorder %s17, 1
      %s197 = scalar_select %p196, %s17, 1
      %s198 = smul.addr %s197, 2
      %s199 = smul.addr %s198, 8
      %s200 = scalar_lea.vmem %s0, %s199
      %p201 = pneg %p38
      %p202 = pneg %p35
      %p203 = pneg %p59
      %p204 = pneg %p56
      %p205 = pneg %p80
      %p206 = pneg %p77
      %p207 = pneg %p101
      %p208 = pneg %p98
      %p209 = pneg %p127
      %p210 = pneg %p124
      %p211 = scmp.lt.s32.totalorder %s17, 1
      %s212 = scalar_select %p211, %s17, 1
      %s213 = smul.addr %s212, 2
      %s214 = smul.addr %s213, 8
      %s215 = scalar_lea.vmem %s4, %s214
      %p216 = pneg %p153
      %p217 = pneg %p150
      %p218 = scmp.lt.s32.totalorder %s17, 1
      %s219 = scalar_select %p218, %s17, 1
      %s220 = smul.addr %s219, 2
      %s221 = scalar_lea.vmem %s5, %s220
      %p222 = scmp.lt.s32.totalorder %s17, 1
      %s223 = scalar_select %p222, %s17, 1
      %s224 = smul.addr %s223, 2
      %s225 = smul.addr %s224, 8
      %s226 = scalar_lea.vmem %s0, %s225
      %p227 = scmp.lt.s32.totalorder %s17, 1
      %s228 = scalar_select %p227, %s17, 1
      %s229 = smul.addr %s228, 2
      %s230 = smul.addr %s229, 8
      %s231 = scalar_lea.vmem %s4, %s230
      %p232 = scmp.lt.s32.totalorder %s17, 1
      %s233 = scalar_select %p232, %s17, 1
      %s234 = smul.addr %s233, 2
      %s235 = scalar_lea.vmem %s5, %s234
      %v236 = vld [vmem:[%s226] sm:$0xff]
      %v237 = vld [vmem:[%s226 + $0x8] sm:$0xff]
      %v238 = vld [vmem:[%s1] sm:$0x1]
      %v240 = vlaneseq
      %v241 = vshrl.u32 %v240, 7
      %v242 = vsub.s32 0, %v241
      %v243 = vrot.slane %v238, %v242
      %v245 = vmul.f32 %v236, %v243
      %v246 = vmul.f32 %v237, %v243
      %v247 = vld [vmem:[%s2] sm:$0x1]
      %v249 = vlaneseq
      %v250 = vshrl.u32 %v249, 7
      %v251 = vsub.s32 0, %v250
      %v252 = vrot.slane %v247, %v251
      %v254 = vadd.f32 %v245, %v252
      %v255 = vadd.f32 %v246, %v252
      %v256 = vmax.f32 %v254, 0.0
      %v257 = vmax.f32 %v255, 0.0
      %258 = vst [vmem:[#allocation2] sm:$0x1] 0.0
      %259 = vst [vmem:[#allocation2 + $0x11] sm:$0x1] 0.0
      %260 = vst [vmem:[#allocation2 + $0x1] sm:$0xff] %v256
      %261 = vst [vmem:[#allocation2 + $0x9] sm:$0xff] %v257
      %v262 = vld [vmem:[#allocation2] sm:$0xff]
      %v263 = vld [vmem:[#allocation2 + $0x8] sm:$0xff]
      %v264 = vld [vmem:[%s3] sm:$0xff]
      %v265 = vld [vmem:[%s3 + $0x8] sm:$0xff]
      %v266 = vld [vmem:[%s3 + $0x10] sm:$0xff]
      %v267 = vld [vmem:[%s3 + $0x18] sm:$0xff]
      %v268 = vld [vmem:[%s3 + $0x20] sm:$0xff]
      %v269 = vld [vmem:[%s3 + $0x28] sm:$0xff]
      %v270 = vld [vmem:[%s3 + $0x30] sm:$0xff]
      %v271 = vld [vmem:[%s3 + $0x38] sm:$0xff]
      %v272 = vld [vmem:[%s3 + $0x40] sm:$0xff]
      %v273 = vld [vmem:[%s3 + $0x48] sm:$0xff]
      %v274 = vld [vmem:[%s3 + $0x50] sm:$0xff]
      %v275 = vld [vmem:[%s3 + $0x58] sm:$0xff]
      %v276 = vld [vmem:[%s3 + $0x60] sm:$0xff]
      %v277 = vld [vmem:[%s3 + $0x68] sm:$0xff]
      %v278 = vld [vmem:[%s3 + $0x70] sm:$0xff]
      %v279 = vld [vmem:[%s3 + $0x78] sm:$0xff]
      %v280 = vld [vmem:[#allocation2 + $0x1] sm:$0xff]
      %v281 = vld [vmem:[#allocation2 + $0x9] sm:$0xff]
      %s282 = scalar_lea.vmem %s3, 128
      %v283 = vld [vmem:[%s282] sm:$0xff]
      %v284 = vld [vmem:[%s282 + $0x8] sm:$0xff]
      %v285 = vld [vmem:[%s282 + $0x10] sm:$0xff]
      %v286 = vld [vmem:[%s282 + $0x18] sm:$0xff]
      %v287 = vld [vmem:[%s282 + $0x20] sm:$0xff]
      %v288 = vld [vmem:[%s282 + $0x28] sm:$0xff]
      %v289 = vld [vmem:[%s282 + $0x30] sm:$0xff]
      %v290 = vld [vmem:[%s282 + $0x38] sm:$0xff]
      %v291 = vld [vmem:[%s282 + $0x40] sm:$0xff]
      %v292 = vld [vmem:[%s282 + $0x48] sm:$0xff]
      %v293 = vld [vmem:[%s282 + $0x50] sm:$0xff]
      %v294 = vld [vmem:[%s282 + $0x58] sm:$0xff]
      %v295 = vld [vmem:[%s282 + $0x60] sm:$0xff]
      %v296 = vld [vmem:[%s282 + $0x68] sm:$0xff]
      %v297 = vld [vmem:[%s282 + $0x70] sm:$0xff]
      %v298 = vld [vmem:[%s282 + $0x78] sm:$0xff]
      %299 = vmatprep.subr.mxu0 0.0
      %300 = vmatpush1.msra.mxu0 %v298
      %301 = vmatprep.subr.mxu0 0.0
      %302 = vmatpush1.msra.mxu0 %v297
      %303 = vmatprep.subr.mxu0 0.0
      %304 = vmatpush1.msra.mxu0 %v296
      %305 = vmatprep.subr.mxu0 0.0
      %306 = vmatpush1.msra.mxu0 %v295
      %307 = vmatprep.subr.mxu0 0.0
      %308 = vmatpush1.msra.mxu0 %v294
      %309 = vmatprep.subr.mxu0 0.0
      %310 = vmatpush1.msra.mxu0 %v293
      %311 = vmatprep.subr.mxu0 0.0
      %312 = vmatpush1.msra.mxu0 %v292
      %313 = vmatprep.subr.mxu0 0.0
      %314 = vmatpush1.msra.mxu0 %v291
      %315 = vmatprep.subr.mxu0 0.0
      %316 = vmatpush1.msra.mxu0 %v290
      %317 = vmatprep.subr.mxu0 0.0
      %318 = vmatpush1.msra.mxu0 %v289
      %319 = vmatprep.subr.mxu0 0.0
      %320 = vmatpush1.msra.mxu0 %v288
      %321 = vmatprep.subr.mxu0 0.0
      %322 = vmatpush1.msra.mxu0 %v287
      %323 = vmatprep.subr.mxu0 0.0
      %324 = vmatpush1.msra.mxu0 %v286
      %325 = vmatprep.subr.mxu0 0.0
      %326 = vmatpush1.msra.mxu0 %v285
      %327 = vmatprep.subr.mxu0 0.0
      %328 = vmatpush1.msra.mxu0 %v284
      %329 = vmatprep.subr.mxu0 0.0
      %330 = vmatpush1.msra.mxu0 %v283
      %331 = vmatprep.subr.mxu0 0.0
      %332 = vmatpush2.msra.mxu0 0.0
      %333 = vmatprep.subr.mxu0 0.0
      %334 = vmatpush2.msra.mxu0 0.0
      %335 = vmatprep.subr.mxu0 0.0
      %336 = vmatpush2.msra.mxu0 0.0
      %337 = vmatprep.subr.mxu0 0.0
      %338 = vmatpush2.msra.mxu0 0.0
      %339 = vmatprep.subr.mxu0 0.0
      %340 = vmatpush2.msra.mxu0 0.0
      %341 = vmatprep.subr.mxu0 0.0
      %342 = vmatpush2.msra.mxu0 0.0
      %343 = vmatprep.subr.mxu0 0.0
      %344 = vmatpush2.msra.mxu0 0.0
      %345 = vmatprep.subr.mxu0 0.0
      %346 = vmatpush2.msra.mxu0 0.0
      %347 = vmatprep.subr.mxu0 0.0
      %348 = vmatpush2.msra.mxu0 0.0
      %349 = vmatprep.subr.mxu0 0.0
      %350 = vmatpush2.msra.mxu0 0.0
      %351 = vmatprep.subr.mxu0 0.0
      %352 = vmatpush2.msra.mxu0 0.0
      %353 = vmatprep.subr.mxu0 0.0
      %354 = vmatpush2.msra.mxu0 0.0
      %355 = vmatprep.subr.mxu0 0.0
      %356 = vmatpush2.msra.mxu0 0.0
      %357 = vmatprep.subr.mxu0 0.0
      %358 = vmatpush2.msra.mxu0 0.0
      %359 = vmatprep.subr.mxu0 0.0
      %360 = vmatpush2.msra.mxu0 0.0
      %361 = vmatprep.subr.mxu0 0.0
      %362 = vmatpush2.msra.mxu0 0.0
      %363 = vmatprep.mubr.f32.mxu0 0.0
      %364 = vmatmul.mubr.f32.gmra.mxu0 %v280
      %v365 = vpop.f32.mrf.mxu0
      %v366 = vadd.f32 0.0, %v365
      %v367 = vpop.f32.mrf.mxu0
      %368 = vmatprep.mubr.f32.mxu0 0.0
      %369 = vmatmul.mubr.f32.gmra.mxu0 %v281
      %v370 = vpop.f32.mrf.mxu0
      %v371 = vadd.f32 0.0, %v370
      %v372 = vpop.f32.mrf.mxu0
      %373 = vdwg.mxu0
      %374 = vmatprep.subr.mxu0 0.0
      %375 = vmatpush1.msra.mxu0 %v279
      %376 = vmatprep.subr.mxu0 0.0
      %377 = vmatpush1.msra.mxu0 %v278
      %378 = vmatprep.subr.mxu0 0.0
      %379 = vmatpush1.msra.mxu0 %v277
      %380 = vmatprep.subr.mxu0 0.0
      %381 = vmatpush1.msra.mxu0 %v276
      %382 = vmatprep.subr.mxu0 0.0
      %383 = vmatpush1.msra.mxu0 %v275
      %384 = vmatprep.subr.mxu0 0.0
      %385 = vmatpush1.msra.mxu0 %v274
      %386 = vmatprep.subr.mxu0 0.0
      %387 = vmatpush1.msra.mxu0 %v273
      %388 = vmatprep.subr.mxu0 0.0
      %389 = vmatpush1.msra.mxu0 %v272
      %390 = vmatprep.subr.mxu0 0.0
      %391 = vmatpush1.msra.mxu0 %v271
      %392 = vmatprep.subr.mxu0 0.0
      %393 = vmatpush1.msra.mxu0 %v270
      %394 = vmatprep.subr.mxu0 0.0
      %395 = vmatpush1.msra.mxu0 %v269
      %396 = vmatprep.subr.mxu0 0.0
      %397 = vmatpush1.msra.mxu0 %v268
      %398 = vmatprep.subr.mxu0 0.0
      %399 = vmatpush1.msra.mxu0 %v267
      %400 = vmatprep.subr.mxu0 0.0
      %401 = vmatpush1.msra.mxu0 %v266
      %402 = vmatprep.subr.mxu0 0.0
      %403 = vmatpush1.msra.mxu0 %v265
      %404 = vmatprep.subr.mxu0 0.0
      %405 = vmatpush1.msra.mxu0 %v264
      %406 = vmatprep.subr.mxu0 0.0
      %407 = vmatpush2.msra.mxu0 0.0
      %408 = vmatprep.subr.mxu0 0.0
      %409 = vmatpush2.msra.mxu0 0.0
      %410 = vmatprep.subr.mxu0 0.0
      %411 = vmatpush2.msra.mxu0 0.0
      %412 = vmatprep.subr.mxu0 0.0
      %413 = vmatpush2.msra.mxu0 0.0
      %414 = vmatprep.subr.mxu0 0.0
      %415 = vmatpush2.msra.mxu0 0.0
      %416 = vmatprep.subr.mxu0 0.0
      %417 = vmatpush2.msra.mxu0 0.0
      %418 = vmatprep.subr.mxu0 0.0
      %419 = vmatpush2.msra.mxu0 0.0
      %420 = vmatprep.subr.mxu0 0.0
      %421 = vmatpush2.msra.mxu0 0.0
      %422 = vmatprep.subr.mxu0 0.0
      %423 = vmatpush2.msra.mxu0 0.0
      %424 = vmatprep.subr.mxu0 0.0
      %425 = vmatpush2.msra.mxu0 0.0
      %426 = vmatprep.subr.mxu0 0.0
      %427 = vmatpush2.msra.mxu0 0.0
      %428 = vmatprep.subr.mxu0 0.0
      %429 = vmatpush2.msra.mxu0 0.0
      %430 = vmatprep.subr.mxu0 0.0
      %431 = vmatpush2.msra.mxu0 0.0
      %432 = vmatprep.subr.mxu0 0.0
      %433 = vmatpush2.msra.mxu0 0.0
      %434 = vmatprep.subr.mxu0 0.0
      %435 = vmatpush2.msra.mxu0 0.0
      %436 = vmatprep.subr.mxu0 0.0
      %437 = vmatpush2.msra.mxu0 0.0
      %438 = vmatprep.mubr.f32.mxu0 0.0
      %439 = vmatmul.mubr.f32.gmra.mxu0 %v262
      %v440 = vpop.f32.mrf.mxu0
      %v441 = vadd.f32 %v366, %v440
      %v442 = vpop.f32.mrf.mxu0
      %443 = vmatprep.mubr.f32.mxu0 0.0
      %444 = vmatmul.mubr.f32.gmra.mxu0 %v263
      %v445 = vpop.f32.mrf.mxu0
      %v446 = vadd.f32 %v371, %v445
      %v447 = vpop.f32.mrf.mxu0
      %448 = vdwg.mxu0
      %v449 = vld [vmem:[#allocation2 + $0x2] sm:$0xff]
      %v450 = vld [vmem:[#allocation2 + $0xa] sm:$0xff]
      %s451 = scalar_lea.vmem %s3, 256
      %v452 = vld [vmem:[%s451] sm:$0xff]
      %v453 = vld [vmem:[%s451 + $0x8] sm:$0xff]
      %v454 = vld [vmem:[%s451 + $0x10] sm:$0xff]
      %v455 = vld [vmem:[%s451 + $0x18] sm:$0xff]
      %v456 = vld [vmem:[%s451 + $0x20] sm:$0xff]
      %v457 = vld [vmem:[%s451 + $0x28] sm:$0xff]
      %v458 = vld [vmem:[%s451 + $0x30] sm:$0xff]
      %v459 = vld [vmem:[%s451 + $0x38] sm:$0xff]
      %v460 = vld [vmem:[%s451 + $0x40] sm:$0xff]
      %v461 = vld [vmem:[%s451 + $0x48] sm:$0xff]
      %v462 = vld [vmem:[%s451 + $0x50] sm:$0xff]
      %v463 = vld [vmem:[%s451 + $0x58] sm:$0xff]
      %v464 = vld [vmem:[%s451 + $0x60] sm:$0xff]
      %v465 = vld [vmem:[%s451 + $0x68] sm:$0xff]
      %v466 = vld [vmem:[%s451 + $0x70] sm:$0xff]
      %v467 = vld [vmem:[%s451 + $0x78] sm:$0xff]
      %468 = vmatprep.subr.mxu0 0.0
      %469 = vmatpush1.msra.mxu0 %v467
      %470 = vmatprep.subr.mxu0 0.0
      %471 = vmatpush1.msra.mxu0 %v466
      %472 = vmatprep.subr.mxu0 0.0
      %473 = vmatpush1.msra.mxu0 %v465
      %474 = vmatprep.subr.mxu0 0.0
      %475 = vmatpush1.msra.mxu0 %v464
      %476 = vmatprep.subr.mxu0 0.0
      %477 = vmatpush1.msra.mxu0 %v463
      %478 = vmatprep.subr.mxu0 0.0
      %479 = vmatpush1.msra.mxu0 %v462
      %480 = vmatprep.subr.mxu0 0.0
      %481 = vmatpush1.msra.mxu0 %v461
      %482 = vmatprep.subr.mxu0 0.0
      %483 = vmatpush1.msra.mxu0 %v460
      %484 = vmatprep.subr.mxu0 0.0
      %485 = vmatpush1.msra.mxu0 %v459
      %486 = vmatprep.subr.mxu0 0.0
      %487 = vmatpush1.msra.mxu0 %v458
      %488 = vmatprep.subr.mxu0 0.0
      %489 = vmatpush1.msra.mxu0 %v457
      %490 = vmatprep.subr.mxu0 0.0
      %491 = vmatpush1.msra.mxu0 %v456
      %492 = vmatprep.subr.mxu0 0.0
      %493 = vmatpush1.msra.mxu0 %v455
      %494 = vmatprep.subr.mxu0 0.0
      %495 = vmatpush1.msra.mxu0 %v454
      %496 = vmatprep.subr.mxu0 0.0
      %497 = vmatpush1.msra.mxu0 %v453
      %498 = vmatprep.subr.mxu0 0.0
      %499 = vmatpush1.msra.mxu0 %v452
      %500 = vmatprep.subr.mxu0 0.0
      %501 = vmatpush2.msra.mxu0 0.0
      %502 = vmatprep.subr.mxu0 0.0
      %503 = vmatpush2.msra.mxu0 0.0
      %504 = vmatprep.subr.mxu0 0.0
      %505 = vmatpush2.msra.mxu0 0.0
      %506 = vmatprep.subr.mxu0 0.0
      %507 = vmatpush2.msra.mxu0 0.0
      %508 = vmatprep.subr.mxu0 0.0
      %509 = vmatpush2.msra.mxu0 0.0
      %510 = vmatprep.subr.mxu0 0.0
      %511 = vmatpush2.msra.mxu0 0.0
      %512 = vmatprep.subr.mxu0 0.0
      %513 = vmatpush2.msra.mxu0 0.0
      %514 = vmatprep.subr.mxu0 0.0
      %515 = vmatpush2.msra.mxu0 0.0
      %516 = vmatprep.subr.mxu0 0.0
      %517 = vmatpush2.msra.mxu0 0.0
      %518 = vmatprep.subr.mxu0 0.0
      %519 = vmatpush2.msra.mxu0 0.0
      %520 = vmatprep.subr.mxu0 0.0
      %521 = vmatpush2.msra.mxu0 0.0
      %522 = vmatprep.subr.mxu0 0.0
      %523 = vmatpush2.msra.mxu0 0.0
      %524 = vmatprep.subr.mxu0 0.0
      %525 = vmatpush2.msra.mxu0 0.0
      %526 = vmatprep.subr.mxu0 0.0
      %527 = vmatpush2.msra.mxu0 0.0
      %528 = vmatprep.subr.mxu0 0.0
      %529 = vmatpush2.msra.mxu0 0.0
      %530 = vmatprep.subr.mxu0 0.0
      %531 = vmatpush2.msra.mxu0 0.0
      %532 = vmatprep.mubr.f32.mxu0 0.0
      %533 = vmatmul.mubr.f32.gmra.mxu0 %v449
      %v534 = vpop.f32.mrf.mxu0
      %v535 = vadd.f32 0.0, %v534
      %v536 = vpop.f32.mrf.mxu0
      %537 = vmatprep.mubr.f32.mxu0 0.0
      %538 = vmatmul.mubr.f32.gmra.mxu0 %v450
      %v539 = vpop.f32.mrf.mxu0
      %v540 = vadd.f32 0.0, %v539
      %v541 = vpop.f32.mrf.mxu0
      %542 = vdwg.mxu0
      %v543 = vadd.f32 %v441, %v535
      %v544 = vadd.f32 %v446, %v540
      %545 = vst [vmem:[%s231] sm:$0xff] %v543
      %546 = vst [vmem:[%s231 + $0x8] sm:$0xff] %v544
      %v547 = vadd.f32 %v543, %v544
      %v548 = vrot.slane %v547, 4
      %v549 = vadd.f32 %v547, %v548
      %v550 = vrot.slane %v549, 2
      %v551 = vadd.f32 %v549, %v550
      %v552 = vrot.slane %v551, 1
      %v553 = vadd.f32 %v551, %v552
      %v554 = vmul.f32 %v543, %v543
      %v555 = vmul.f32 %v544, %v544
      %v556 = vadd.f32 %v554, %v555
      %v557 = vrot.slane %v556, 4
      %v558 = vadd.f32 %v556, %v557
      %v559 = vrot.slane %v558, 2
      %v560 = vadd.f32 %v558, %v559
      %v561 = vrot.slane %v560, 1
      %v562 = vadd.f32 %v560, %v561
      %vm563 = vcmask 1040384
      %v564 = vsel %vm563, %v553, %v562
      %565 = vst [vmem:[%s235] sm:$0x3] %v564
      %p566 = scmp.lt.s32.totalorder %s17, 1
      %s567 = scalar_select %p566, %s17, 1
      %s568 = smul.addr %s567, 2
      %s569 = smul.addr %s568, 8
      %s570 = scalar_lea.vmem %s4, %s569
      %p571 = scmp.lt.s32.totalorder %s17, 1
      %s572 = scalar_select %p571, %s17, 1
      %s573 = smul.addr %s572, 2
      %s574 = scalar_lea.vmem %s5, %s573
      // Predicated region
      $region37: #{basic_block_forward.4} parent=35 // pred_check
        %p575 = pneg %p124
      $region38: #{basic_block_forward.4} parent=35 // pred_check_branch
        %577 = sbr.rel (%p575) target = $region40
      $region39: #{basic_block_forward.4} parent=35 // pred_region
        _
      $region40: #{basic_block_forward.4} parent=35 // pred_fallthru
        _
      // Predicated region
      $region41: #{basic_block_forward.4} parent=35 // pred_check
        %p578 = pneg %p150
      $region42: #{basic_block_forward.4} parent=35 // pred_check_branch
        %580 = sbr.rel (%p578) target = $region44
      $region43: #{basic_block_forward.4} parent=35 // pred_region
        _
      $region44: #{basic_block_forward.4} parent=35 // pred_fallthru
        _
    $region36: #{basic_block_forward.4} parent=5 // pred_fallthru
      _
    %p581 = scmp.le.s32.totalorder 2, %s12
    // Predicated region
    $region45: #{basic_block_forward.4} parent=5 // pred_check
      %p582 = pneg %p581
    $region46: #{basic_block_forward.4} parent=5 // pred_check_branch
      %584 = sbr.rel (%p582) target = $region48
    $region47: #{basic_block_forward.4} parent=5 // pred_region
      %s585 = ssub.s32 %s12, 2
      // Predicated region
      $region49: #{basic_block_forward.4} parent=47 // pred_check
        %p586 = pneg %p130
      $region50: #{basic_block_forward.4} parent=47 // pred_check_branch
        %588 = sbr.rel (%p586) target = $region52
      $region51: #{basic_block_forward.4} parent=47 // pred_region
        %p589 = scmp.lt.s32.totalorder %s18, 1
        %s590 = scalar_select %p589, %s18, 1
        %s591 = smul.addr %s590, 2
        %s592 = smul.addr %s591, 8
        %s593 = scalar_lea.vmem %s4, %s592
      $region52: #{basic_block_forward.4} parent=47 // pred_fallthru
        _
      // Predicated region
      $region53: #{basic_block_forward.4} parent=47 // pred_check
        %p594 = pneg %p156
      $region54: #{basic_block_forward.4} parent=47 // pred_check_branch
        %596 = sbr.rel (%p594) target = $region56
      $region55: #{basic_block_forward.4} parent=47 // pred_region
        %p597 = scmp.lt.s32.totalorder %s18, 1
        %s598 = scalar_select %p597, %s18, 1
        %s599 = smul.addr %s598, 2
        %s600 = scalar_lea.vmem %s5, %s599
      $region56: #{basic_block_forward.4} parent=47 // pred_fallthru
        _
    $region48: #{basic_block_forward.4} parent=5 // pred_fallthru
      _
  $region6: #{basic_block_forward.4} parent=0 // loop_footer
    %s16 = sadd.s32 1, %s12
  $region7: #{basic_block_forward.4} parent=0 // loop_footer_branch
    %11 = sbr.rel target = $region3
  $region8: #{basic_block_forward.4} parent=0 // loop_exit
    _

// kernel: basic_block_forward.5
$region0: #{basic_block_forward.5}
  #allocation0 [shape = 'u32[]', space=smem, size = 0x4, offset = 0x4, fixed_abs, tag = 'smem constant byte address 0x4 - core index']
  #allocation1 [shape = 'u32[144,128]{1,0:T(1,128)}', space=vmem, size = 0x12000, scoped, tag = 'internal scratch']
  %s0 = inlined_call_operand.vmem [shape: f32[2,16,128], index: 0, kind: input, shape index: {}]
  %s1 = inlined_call_operand.vmem [shape: f32[2,16,128], index: 1, kind: input, shape index: {}]
  %s2 = inlined_call_operand.vmem [shape: f32[1,128], index: 2, kind: input, shape index: {}]
  %s3 = inlined_call_operand.vmem [shape: f32[1,128], index: 3, kind: input, shape index: {}]
  %s4 = inlined_call_operand.vmem [shape: f32[2,1,128], index: 4, kind: input, shape index: {}]
  %s5 = inlined_call_operand.vmem [shape: f32[2,16,128], index: 5, kind: output, shape index: {}]
  %s6 = sld [smem:[#allocation0]]
  $region53: #{basic_block_forward.5} parent=0
    _
  %s8 = ssub.s32 1, %s6
  %s9 = scalar_select 0, %s8, %s6
  loop: start=0, step=1, limit=4
  $region2: #{basic_block_forward.5} parent=0 // loop_pre_header
    _
  $region3: #{basic_block_forward.5} parent=0 // loop_header
    %s11 = sphi 0, %s15
    %p12 = scmp.ge.s32.totalorder %s11, 4
    %s21 = sphi 0, %s23
    %s24 = sphi 0, %s21
    %s25 = sphi 0, %s24
    %s41 = sphi 0, %s25
    %s47 = sphi 0, %s49
    %s50 = sphi 0, %s47
    %s51 = sphi 0, %s50
    %s67 = sphi 0, %s51
    %s71 = sphi 0, %s71
    %s73 = sphi 0, %s71
    %s74 = sphi 0, %s73
    %s88 = sphi 0, %s74
    %s92 = sphi 0, %s92
    %s94 = sphi 0, %s92
    %s95 = sphi 0, %s94
    %s109 = sphi 0, %s95
    %s115 = sphi 0, %s117
    %s118 = sphi 0, %s115
    %s119 = sphi 0, %s118
    %s135 = sphi 0, %s119
    %s141 = sphi 0, %s143
    %s144 = sphi 0, %s141
    %s145 = sphi 0, %s144
    %s161 = sphi 0, %s145
  $region4: #{basic_block_forward.5} parent=0 // loop_header_branch
    %14 = sbr.rel (%p12) target = $region8
  $region5: #{basic_block_forward.5} parent=0 // loop_body
    %s16 = ssub.s32 %s11, 1
    %s17 = ssub.s32 %s11, 2
    %s18 = sadd.s32 %s11, 1
    %s19 = ssub.s32 %s11, %s18
    %p20 = scmp.eq.s32.totalorder %s19, 0
    %s22 = sadd.s32 %s21, 1
    %s23 = scalar_select %p20, %s21, %s22
    %p26 = pneg %p20
    %p27 = scmp.eq.s32.totalorder %s11, 1
    %p28 = por %p26, %p27
    %p29 = scmp.ne.s32.totalorder %s21, %s24
    %p30 = scmp.eq.s32.totalorder %s11, 0
    %p31 = por %p29, %p30
    %p32 = scmp.ne.s32.totalorder %s21, %s24
    %p33 = scmp.eq.s32.totalorder %s16, 1
    %p34 = por %p32, %p33
    %p35 = scmp.ne.s32.totalorder %s24, %s25
    %p36 = scmp.eq.s32.totalorder %s16, 0
    %p37 = por %p35, %p36
    %p38 = scmp.ne.s32.totalorder %s24, %s25
    %p39 = scmp.eq.s32.totalorder %s17, 1
    %p40 = por %p38, %p39
    %p42 = scmp.ne.s32.totalorder %s25, %s41
    %p43 = scmp.eq.s32.totalorder %s17, 0
    %p44 = por %p42, %p43
    %s45 = ssub.s32 %s11, %s18
    %p46 = scmp.eq.s32.totalorder %s45, 0
    %s48 = sadd.s32 %s47, 1
    %s49 = scalar_select %p46, %s47, %s48
    %p52 = pneg %p46
    %p53 = scmp.eq.s32.totalorder %s11, 1
    %p54 = por %p52, %p53
    %p55 = scmp.ne.s32.totalorder %s47, %s50
    %p56 = scmp.eq.s32.totalorder %s11, 0
    %p57 = por %p55, %p56
    %p58 = scmp.ne.s32.totalorder %s47, %s50
    %p59 = scmp.eq.s32.totalorder %s16, 1
    %p60 = por %p58, %p59
    %p61 = scmp.ne.s32.totalorder %s50, %s51
    %p62 = scmp.eq.s32.totalorder %s16, 0
    %p63 = por %p61, %p62
    %p64 = scmp.ne.s32.totalorder %s50, %s51
    %p65 = scmp.eq.s32.totalorder %s17, 1
    %p66 = por %p64, %p65
    %p68 = scmp.ne.s32.totalorder %s51, %s67
    %p69 = scmp.eq.s32.totalorder %s17, 0
    %p70 = por %p68, %p69
    %s72 = sadd.s32 %s71, 1
    %p75 = scmp.eq.s32.totalorder %s11, 1
    %p76 = scmp.ne.s32.totalorder %s71, %s73
    %p77 = scmp.eq.s32.totalorder %s11, 0
    %p78 = por %p76, %p77
    %p79 = scmp.ne.s32.totalorder %s71, %s73
    %p80 = scmp.eq.s32.totalorder %s16, 1
    %p81 = por %p79, %p80
    %p82 = scmp.ne.s32.totalorder %s73, %s74
    %p83 = scmp.eq.s32.totalorder %s16, 0
    %p84 = por %p82, %p83
    %p85 = scmp.ne.s32.totalorder %s73, %s74
    %p86 = scmp.eq.s32.totalorder %s17, 1
    %p87 = por %p85, %p86
    %p89 = scmp.ne.s32.totalorder %s74, %s88
    %p90 = scmp.eq.s32.totalorder %s17, 0
    %p91 = por %p89, %p90
    %s93 = sadd.s32 %s92, 1
    %p96 = scmp.eq.s32.totalorder %s11, 1
    %p97 = scmp.ne.s32.totalorder %s92, %s94
    %p98 = scmp.eq.s32.totalorder %s11, 0
    %p99 = por %p97, %p98
    %p100 = scmp.ne.s32.totalorder %s92, %s94
    %p101 = scmp.eq.s32.totalorder %s16, 1
    %p102 = por %p100, %p101
    %p103 = scmp.ne.s32.totalorder %s94, %s95
    %p104 = scmp.eq.s32.totalorder %s16, 0
    %p105 = por %p103, %p104
    %p106 = scmp.ne.s32.totalorder %s94, %s95
    %p107 = scmp.eq.s32.totalorder %s17, 1
    %p108 = por %p106, %p107
    %p110 = scmp.ne.s32.totalorder %s95, %s109
    %p111 = scmp.eq.s32.totalorder %s17, 0
    %p112 = por %p110, %p111
    %s113 = ssub.s32 %s11, %s18
    %p114 = scmp.eq.s32.totalorder %s113, 0
    %s116 = sadd.s32 %s115, 1
    %s117 = scalar_select %p114, %s115, %s116
    %p120 = pneg %p114
    %p121 = scmp.eq.s32.totalorder %s11, 1
    %p122 = por %p120, %p121
    %p123 = scmp.ne.s32.totalorder %s115, %s118
    %p124 = scmp.eq.s32.totalorder %s11, 0
    %p125 = por %p123, %p124
    %p126 = scmp.ne.s32.totalorder %s115, %s118
    %p127 = scmp.eq.s32.totalorder %s16, 1
    %p128 = por %p126, %p127
    %p129 = scmp.ne.s32.totalorder %s118, %s119
    %p130 = scmp.eq.s32.totalorder %s16, 0
    %p131 = por %p129, %p130
    %p132 = scmp.ne.s32.totalorder %s118, %s119
    %p133 = scmp.eq.s32.totalorder %s17, 1
    %p134 = por %p132, %p133
    %p136 = scmp.ne.s32.totalorder %s119, %s135
    %p137 = scmp.eq.s32.totalorder %s17, 0
    %p138 = por %p136, %p137
    %s139 = ssub.s32 %s11, %s18
    %p140 = scmp.eq.s32.totalorder %s139, 0
    %s142 = sadd.s32 %s141, 1
    %s143 = scalar_select %p140, %s141, %s142
    %p146 = pneg %p140
    %p147 = scmp.eq.s32.totalorder %s11, 1
    %p148 = por %p146, %p147
    %p149 = scmp.ne.s32.totalorder %s141, %s144
    %p150 = scmp.eq.s32.totalorder %s11, 0
    %p151 = por %p149, %p150
    %p152 = scmp.ne.s32.totalorder %s141, %s144
    %p153 = scmp.eq.s32.totalorder %s16, 1
    %p154 = por %p152, %p153
    %p155 = scmp.ne.s32.totalorder %s144, %s145
    %p156 = scmp.eq.s32.totalorder %s16, 0
    %p157 = por %p155, %p156
    %p158 = scmp.ne.s32.totalorder %s144, %s145
    %p159 = scmp.eq.s32.totalorder %s17, 1
    %p160 = por %p158, %p159
    %p162 = scmp.ne.s32.totalorder %s145, %s161
    %p163 = scmp.eq.s32.totalorder %s17, 0
    %p164 = por %p162, %p163
    %p165 = scmp.le.s32.totalorder 1, %s11
    %p166 = scmp.lt.s32.totalorder %s11, 3
    %p167 = pnand %p165, %p166
    %p168 = pneg %p167
    // Predicated region
    $region9: #{basic_block_forward.5} parent=5 // pred_check
      _
    $region10: #{basic_block_forward.5} parent=5 // pred_check_branch
      %170 = sbr.rel (%p167) target = $region12
    $region11: #{basic_block_forward.5} parent=5 // pred_region
      %s171 = ssub.s32 %s11, 1
      // Predicated region
      $region13: #{basic_block_forward.5} parent=11 // pred_check
        %p172 = pneg %p84
      $region14: #{basic_block_forward.5} parent=11 // pred_check_branch
        %174 = sbr.rel (%p172) target = $region16
      $region15: #{basic_block_forward.5} parent=11 // pred_region
        _
      $region16: #{basic_block_forward.5} parent=11 // pred_fallthru
        _
      // Predicated region
      $region17: #{basic_block_forward.5} parent=11 // pred_check
        %p175 = pneg %p105
      $region18: #{basic_block_forward.5} parent=11 // pred_check_branch
        %177 = sbr.rel (%p175) target = $region20
      $region19: #{basic_block_forward.5} parent=11 // pred_region
        _
      $region20: #{basic_block_forward.5} parent=11 // pred_fallthru
        _
    $region12: #{basic_block_forward.5} parent=5 // pred_fallthru
      _
    %p178 = scmp.lt.s32.totalorder %s11, 2
    // Predicated region
    $region21: #{basic_block_forward.5} parent=5 // pred_check
      %p179 = pneg %p178
    $region22: #{basic_block_forward.5} parent=5 // pred_check_branch
      %181 = sbr.rel (%p179) target = $region24
    $region23: #{basic_block_forward.5} parent=5 // pred_region
      // Predicated region
      $region25: #{basic_block_forward.5} parent=23 // pred_check
        %p182 = pneg %p31
      $region26: #{basic_block_forward.5} parent=23 // pred_check_branch
        %184 = sbr.rel (%p182) target = $region28
      $region27: #{basic_block_forward.5} parent=23 // pred_region
        %p185 = scmp.lt.s32.totalorder %s11, 1
        %s186 = scalar_select %p185, %s11, 1
        %s187 = smul.addr %s186, 2
        %s188 = smul.addr %s187, 8
        %s189 = scalar_lea.vmem %s0, %s188
      $region28: #{basic_block_forward.5} parent=23 // pred_fallthru
        _
      // Predicated region
      $region29: #{basic_block_forward.5} parent=23 // pred_check
        %p190 = pneg %p57
      $region30: #{basic_block_forward.5} parent=23 // pred_check_branch
        %192 = sbr.rel (%p190) target = $region32
      $region31: #{basic_block_forward.5} parent=23 // pred_region
        %p193 = scmp.lt.s32.totalorder %s11, 1
        %s194 = scalar_select %p193, %s11, 1
        %s195 = smul.addr %s194, 2
        %s196 = smul.addr %s195, 8
        %s197 = scalar_lea.vmem %s1, %s196
      $region32: #{basic_block_forward.5} parent=23 // pred_fallthru
        _
      // Predicated region
      $region33: #{basic_block_forward.5} parent=23 // pred_check
        %p198 = pneg %p125
      $region34: #{basic_block_forward.5} parent=23 // pred_check_branch
        %200 = sbr.rel (%p198) target = $region36
      $region35: #{basic_block_forward.5} parent=23 // pred_region
        %p201 = scmp.lt.s32.totalorder %s11, 1
        %s202 = scalar_select %p201, %s11, 1
        %s203 = scalar_lea.vmem %s4, %s202
      $region36: #{basic_block_forward.5} parent=23 // pred_fallthru
        _
    $region24: #{basic_block_forward.5} parent=5 // pred_fallthru
      _
    %p204 = scmp.le.s32.totalorder 1, %s11
    %p205 = scmp.lt.s32.totalorder %s11, 3
    %p206 = pnand %p204, %p205
    %p207 = pneg %p206
    // Predicated region
    $region37: #{basic_block_forward.5} parent=5 // pred_check
      _
    $region38: #{basic_block_forward.5} parent=5 // pred_check_branch
      %209 = sbr.rel (%p206) target = $region40
    $region39: #{basic_block_forward.5} parent=5 // pred_region
      %s210 = ssub.s32 %s11, 1
      %p211 = scmp.lt.s32.totalorder %s16, 1
      %s212 = scalar_select %p211, %s16, 1
      %s213 = smul.addr %s212, 2
      %s214 = smul.addr %s213, 8
      %s215 = scalar_lea.vmem %s0, %s214
      %p216 = pneg %p37
      %p217 = pneg %p34
      %p218 = scmp.lt.s32.totalorder %s16, 1
      %s219 = scalar_select %p218, %s16, 1
      %s220 = smul.addr %s219, 2
      %s221 = smul.addr %s220, 8
      %s222 = scalar_lea.vmem %s1, %s221
      %p223 = pneg %p63
      %p224 = pneg %p60
      %p225 = pneg %p84
      %p226 = pneg %p81
      %p227 = pneg %p105
      %p228 = pneg %p102
      %p229 = scmp.lt.s32.totalorder %s16, 1
      %s230 = scalar_select %p229, %s16, 1
      %s231 = scalar_lea.vmem %s4, %s230
      %p232 = pneg %p131
      %p233 = pneg %p128
      %p234 = pneg %p157
      %p235 = pneg %p154
      %p236 = scmp.lt.s32.totalorder %s16, 1
      %s237 = scalar_select %p236, %s16, 1
      %s238 = smul.addr %s237, 2
      %s239 = smul.addr %s238, 8
      %s240 = scalar_lea.vmem %s5, %s239
      %p241 = scmp.lt.s32.totalorder %s16, 1
      %s242 = scalar_select %p241, %s16, 1
      %s243 = smul.addr %s242, 2
      %s244 = smul.addr %s243, 8
      %s245 = scalar_lea.vmem %s0, %s244
      %p246 = scmp.lt.s32.totalorder %s16, 1
      %s247 = scalar_select %p246, %s16, 1
      %s248 = smul.addr %s247, 2
      %s249 = smul.addr %s248, 8
      %s250 = scalar_lea.vmem %s1, %s249
      %p251 = scmp.lt.s32.totalorder %s16, 1
      %s252 = scalar_select %p251, %s16, 1
      %s253 = scalar_lea.vmem %s4, %s252
      %p254 = scmp.lt.s32.totalorder %s16, 1
      %s255 = scalar_select %p254, %s16, 1
      %s256 = smul.addr %s255, 2
      %s257 = smul.addr %s256, 8
      %s258 = scalar_lea.vmem %s5, %s257
      %v259 = vld [vmem:[%s245] sm:$0xff]
      %v260 = vld [vmem:[%s245 + $0x8] sm:$0xff]
      %v261 = vld [vmem:[%s2] sm:$0x1]
      %v263 = vlaneseq
      %v264 = vshrl.u32 %v263, 7
      %v265 = vsub.s32 0, %v264
      %v266 = vrot.slane %v261, %v265
      %v268 = vmul.f32 %v259, %v266
      %v269 = vmul.f32 %v260, %v266
      %v270 = vld [vmem:[%s3] sm:$0x1]
      %v272 = vlaneseq
      %v273 = vshrl.u32 %v272, 7
      %v274 = vsub.s32 0, %v273
      %v275 = vrot.slane %v270, %v274
      %v277 = vadd.f32 %v268, %v275
      %v278 = vadd.f32 %v269, %v275
      %v279 = vld [vmem:[%s253] sm:$0x1]
      %v281 = vlaneseq
      %v282 = vshrl.u32 %v281, 7
      %v283 = vsub.s32 0, %v282
      %v284 = vrot.slane %v279, %v283
      %v286 = vmul.f32 %v277, %v284
      %v287 = vmul.f32 %v278, %v284
      %v288 = vld [vmem:[%s250] sm:$0xff]
      %v289 = vld [vmem:[%s250 + $0x8] sm:$0xff]
      %v290 = vadd.f32 %v286, %v288
      %v291 = vadd.f32 %v287, %v289
      %v292 = vmax.f32 %v290, 0.0
      %v293 = vmax.f32 %v291, 0.0
      %294 = vst [vmem:[%s258] sm:$0xff] %v292
      %295 = vst [vmem:[%s258 + $0x8] sm:$0xff] %v293
      %p296 = scmp.lt.s32.totalorder %s16, 1
      %s297 = scalar_select %p296, %s16, 1
      %s298 = smul.addr %s297, 2
      %s299 = smul.addr %s298, 8
      %s300 = scalar_lea.vmem %s5, %s299
      // Predicated region
      $region41: #{basic_block_forward.5} parent=39 // pred_check
        %p301 = pneg %p154
      $region42: #{basic_block_forward.5} parent=39 // pred_check_branch
        %303 = sbr.rel (%p301) target = $region44
      $region43: #{basic_block_forward.5} parent=39 // pred_region
        _
      $region44: #{basic_block_forward.5} parent=39 // pred_fallthru
        _
    $region40: #{basic_block_forward.5} parent=5 // pred_fallthru
      _
    %p304 = scmp.le.s32.totalorder 2, %s11
    // Predicated region
    $region45: #{basic_block_forward.5} parent=5 // pred_check
      %p305 = pneg %p304
    $region46: #{basic_block_forward.5} parent=5 // pred_check_branch
      %307 = sbr.rel (%p305) target = $region48
    $region47: #{basic_block_forward.5} parent=5 // pred_region
      %s308 = ssub.s32 %s11, 2
      // Predicated region
      $region49: #{basic_block_forward.5} parent=47 // pred_check
        %p309 = pneg %p160
      $region50: #{basic_block_forward.5} parent=47 // pred_check_branch
        %311 = sbr.rel (%p309) target = $region52
      $region51: #{basic_block_forward.5} parent=47 // pred_region
        %p312 = scmp.lt.s32.totalorder %s17, 1
        %s313 = scalar_select %p312, %s17, 1
        %s314 = smul.addr %s313, 2
        %s315 = smul.addr %s314, 8
        %s316 = scalar_lea.vmem %s5, %s315
      $region52: #{basic_block_forward.5} parent=47 // pred_fallthru
        _
    $region48: #{basic_block_forward.5} parent=5 // pred_fallthru
      _
  $region6: #{basic_block_forward.5} parent=0 // loop_footer
    %s15 = sadd.s32 1, %s11
  $region7: #{basic_block_forward.5} parent=0 // loop_footer_branch
    %10 = sbr.rel target = $region3
  $region8: #{basic_block_forward.5} parent=0 // loop_exit
    _

</llo_original>
